<compile_context>
chip_gen: v5e
topology: v5e:2x2
jax: 0.10.0
libtpu: 0.0.40
codegen_flags: <defaults>
</compile_context>

<pallas_src>
import jax
import jax.numpy as jnp
from jax.experimental import pallas as pl
from jax.experimental.pallas import tpu as pltpu


def _actionness_kernel(xpad_ref, w_emb_ref, b_emb_ref, w_cls_ref,
                       emb_ref, cas_ref, act_ref):
    # xpad_ref : (1, T+2, F)  input with 1-row zero halo on each side of T
    # w_emb_ref: (3F, E)      conv1d(k=3) weight, taps stacked along rows
    # b_emb_ref: (1, E)       conv1d(k=3) bias
    # w_cls_ref: (E, Cp)      conv1d(k=1) weight, classes zero-padded to 128 lanes
    # emb_ref  : (1, T, E)    embeddings out
    # cas_ref  : (1, T, Cp)   class activations out (lane-padded)
    # act_ref  : (1, T, 1)    actionness out
    T = emb_ref.shape[1]
    F = xpad_ref.shape[2]

    # Three conv taps = three overlapping T-row windows of the padded input.
    x_m1 = xpad_ref[0, pl.ds(0, T), :]   # x[t-1]
    x_00 = xpad_ref[0, pl.ds(1, T), :]   # x[t]
    x_p1 = xpad_ref[0, pl.ds(2, T), :]   # x[t+1]

    emb = (
        jnp.dot(x_m1, w_emb_ref[0 * F:1 * F, :], preferred_element_type=jnp.float32)
        + jnp.dot(x_00, w_emb_ref[1 * F:2 * F, :], preferred_element_type=jnp.float32)
        + jnp.dot(x_p1, w_emb_ref[2 * F:3 * F, :], preferred_element_type=jnp.float32)
        + b_emb_ref[...]
    )
    emb = jnp.maximum(emb, 0.0)          # ReLU, (T, E) — lane-dense store (E=2048)
    emb_ref[0] = emb

    # Dropout(p=0.7) between f_embed and f_cls is identity at inference.
    # TODO(synk): training-mode dropout (scaled Bernoulli mask via pltpu PRNG) not implemented.

    cas = jnp.maximum(
        jnp.dot(emb, w_cls_ref[...], preferred_element_type=jnp.float32), 0.0)
    cas_ref[0] = cas                     # (T, Cp) — full 128-lane unmasked store

    # cas >= 0 after ReLU, so zero-padded class lanes never win the max.
    act_ref[0] = jnp.max(cas, axis=-1, keepdims=True)


def simple_actionness_forward(x, w_embed, b_embed, w_cls):
    """x: (B,T,F); w_embed: (E,F,3); b_embed: (E,); w_cls: (C,E,1).

    Returns (embeddings (B,T,E), cas (B,T,C), actionness (B,T))."""
    B, T, F = x.shape
    E = w_embed.shape[0]
    C = w_cls.shape[0]
    LANE = 128
    Cp = pl.cdiv(C, LANE) * LANE

    x32 = x.astype(jnp.float32)
    # Temporal halo for the k=3 / pad=1 conv (layout plumbing, done once in the wrapper).
    x_pad = jnp.pad(x32, ((0, 0), (1, 1), (0, 0)))

    # Conv1d(k=3) weight (E, F, 3) -> (3F, E): row block k holds tap k (applied to x[t-1+k]).
    w_emb_mat = jnp.transpose(w_embed.astype(jnp.float32), (2, 1, 0)).reshape(3 * F, E)
    b_emb_row = b_embed.astype(jnp.float32).reshape(1, E)
    # Conv1d(k=1, no bias) weight (C, E, 1) -> (E, C), zero-padded to Cp lanes.
    w_cls_mat = jnp.transpose(w_cls[:, :, 0].astype(jnp.float32), (1, 0))       # (E, C)
    w_cls_pad = jnp.zeros((E, Cp), jnp.float32).at[:, :C].set(w_cls_mat)

    emb, cas_p, act = pl.pallas_call(
        _actionness_kernel,
        out_shape=(
            jax.ShapeDtypeStruct((B, T, E), jnp.float32),
            jax.ShapeDtypeStruct((B, T, Cp), jnp.float32),
            jax.ShapeDtypeStruct((B, T, 1), jnp.float32),
        ),
        grid_spec=pltpu.PrefetchScalarGridSpec(
            num_scalar_prefetch=0,
            grid=(B,),
            in_specs=[
                pl.BlockSpec((1, T + 2, F), lambda b: (b, 0, 0)),  # padded input row
                pl.BlockSpec((3 * F, E), lambda b: (0, 0)),        # conv3 weights (resident)
                pl.BlockSpec((1, E), lambda b: (0, 0)),            # conv3 bias (resident)
                pl.BlockSpec((E, Cp), lambda b: (0, 0)),           # cls weights (resident)
            ],
            out_specs=[
                pl.BlockSpec((1, T, E), lambda b: (b, 0, 0)),      # embeddings
                pl.BlockSpec((1, T, Cp), lambda b: (b, 0, 0)),     # cas (lane-padded)
                pl.BlockSpec((1, T, 1), lambda b: (b, 0, 0)),      # actionness
            ],
        ),
        compiler_params=pltpu.CompilerParams(
            dimension_semantics=("parallel",),
        ),
    )(x_pad, w_emb_mat, b_emb_row, w_cls_pad)

    return emb, cas_p[:, :, :C], act[:, :, 0]


def _reference(x, w_embed, b_embed, w_cls):
    B, T, F = x.shape
    E = w_embed.shape[0]
    hp = jax.lax.Precision.HIGHEST
    xp = jnp.pad(x, ((0, 0), (1, 1), (0, 0)))
    emb = b_embed.reshape(1, 1, E)
    emb = emb + jnp.einsum("btf,ef->bte", xp[:, 0:T], w_embed[:, :, 0], precision=hp)
    emb = emb + jnp.einsum("btf,ef->bte", xp[:, 1:T + 1], w_embed[:, :, 1], precision=hp)
    emb = emb + jnp.einsum("btf,ef->bte", xp[:, 2:T + 2], w_embed[:, :, 2], precision=hp)
    emb = jnp.maximum(emb, 0.0)
    cas = jnp.maximum(
        jnp.einsum("bte,ce->btc", emb, w_cls[:, :, 0], precision=hp), 0.0)
    act = jnp.max(cas, axis=-1)
    return emb, cas, act


if __name__ == "__main__":
    # batch=2, temporal=8, len_feature=32, embed=2048 (fixed by module), num_classes=4
    B, T, F, E, C = 2, 8, 32, 2048, 4

    key = jax.random.PRNGKey(0)
    kx, kw1, kb1, kw2 = jax.random.split(key, 4)
    x = jax.random.normal(kx, (B, T, F), dtype=jnp.float32)
    w_embed = jax.random.normal(kw1, (E, F, 3), dtype=jnp.float32) * 0.05
    b_embed = jax.random.normal(kb1, (E,), dtype=jnp.float32) * 0.05
    w_cls = jax.random.normal(kw2, (C, E, 1), dtype=jnp.float32) * 0.02

    emb, cas, act = simple_actionness_forward(x, w_embed, b_embed, w_cls)
    jax.block_until_ready((emb, cas, act))

    emb_r, cas_r, act_r = _reference(x, w_embed, b_embed, w_cls)
    assert emb.shape == (B, T, E) and cas.shape == (B, T, C) and act.shape == (B, T)
    assert jnp.allclose(emb, emb_r, atol=2e-3, rtol=2e-3)
    assert jnp.allclose(cas, cas_r, atol=2e-3, rtol=2e-3)
    assert jnp.allclose(act, act_r, atol=2e-3, rtol=2e-3)

    print("KERNEL_OK")
</pallas_src>

<mosaic_0001>
module attributes {stable_mosaic.version = 11 : i64} {
  func.func @_actionness_kernel(%arg0: i32, %arg1: memref<1x10x32xf32, #tpu.memory_space<vmem>>, %arg2: memref<96x2048xf32, #tpu.memory_space<vmem>>, %arg3: memref<1x2048xf32, #tpu.memory_space<vmem>>, %arg4: memref<2048x128xf32, #tpu.memory_space<vmem>>, %arg5: memref<1x8x2048xf32, #tpu.memory_space<vmem>>, %arg6: memref<1x8x128xf32, #tpu.memory_space<vmem>>, %arg7: memref<1x8x1xf32, #tpu.memory_space<vmem>>) attributes {dimension_semantics = [#tpu.dimension_semantics<parallel>], iteration_bounds = array<i64: 2>, scalar_prefetch = 0 : i64, scratch_operands = 0 : i64, tpu.core_type = #tpu.core_type<tc>, window_params = [{transform_indices = @transform_0, window_bounds = array<i64: 1, 10, 32>}, {pipeline_mode = #tpu.pipeline_mode<synchronous>, transform_indices = @transform_1, window_bounds = array<i64: 96, 2048>}, {pipeline_mode = #tpu.pipeline_mode<synchronous>, transform_indices = @transform_2, window_bounds = array<i64: 1, 2048>}, {pipeline_mode = #tpu.pipeline_mode<synchronous>, transform_indices = @transform_3, window_bounds = array<i64: 2048, 128>}, {transform_indices = @transform_4, window_bounds = array<i64: 1, 8, 2048>}, {transform_indices = @transform_5, window_bounds = array<i64: 1, 8, 128>}, {transform_indices = @transform_6, window_bounds = array<i64: 1, 8, 1>}]} {
    %c0 = arith.constant 0 : index
    %c0_0 = arith.constant 0 : index
    %c0_1 = arith.constant 0 : index
    %0 = vector.load %arg1[%c0, %c0_0, %c0_1] : memref<1x10x32xf32, #tpu.memory_space<vmem>>, vector<1x8x32xf32>
    %1 = vector.shape_cast %0 : vector<1x8x32xf32> to vector<8x32xf32>
    %c0_2 = arith.constant 0 : index
    %c1 = arith.constant 1 : index
    %c0_3 = arith.constant 0 : index
    %2 = vector.load %arg1[%c0_2, %c1, %c0_3] : memref<1x10x32xf32, #tpu.memory_space<vmem>>, vector<1x8x32xf32>
    %3 = vector.shape_cast %2 : vector<1x8x32xf32> to vector<8x32xf32>
    %c0_4 = arith.constant 0 : index
    %c2 = arith.constant 2 : index
    %c0_5 = arith.constant 0 : index
    %4 = vector.load %arg1[%c0_4, %c2, %c0_5] : memref<1x10x32xf32, #tpu.memory_space<vmem>>, vector<1x8x32xf32>
    %5 = vector.shape_cast %4 : vector<1x8x32xf32> to vector<8x32xf32>
    %c0_6 = arith.constant 0 : index
    %c0_7 = arith.constant 0 : index
    %6 = vector.load %arg2[%c0_6, %c0_7] : memref<96x2048xf32, #tpu.memory_space<vmem>>, vector<32x2048xf32>
    %cst = arith.constant dense<0.000000e+00> : vector<8x2048xf32>
    %7 = tpu.matmul %1, %6, %cst {dimension_numbers = #tpu.dot_dimension_numbers<[1], [0], [0], [1], [0, 0, 1, 1], [], []>} : vector<8x32xf32>, vector<32x2048xf32>, vector<8x2048xf32> -> vector<8x2048xf32>
    %c32 = arith.constant 32 : index
    %c0_8 = arith.constant 0 : index
    %8 = vector.load %arg2[%c32, %c0_8] : memref<96x2048xf32, #tpu.memory_space<vmem>>, vector<32x2048xf32>
    %cst_9 = arith.constant dense<0.000000e+00> : vector<8x2048xf32>
    %9 = tpu.matmul %3, %8, %cst_9 {dimension_numbers = #tpu.dot_dimension_numbers<[1], [0], [0], [1], [0, 0, 1, 1], [], []>} : vector<8x32xf32>, vector<32x2048xf32>, vector<8x2048xf32> -> vector<8x2048xf32>
    %10 = arith.addf %7, %9 : vector<8x2048xf32>
    %c64 = arith.constant 64 : index
    %c0_10 = arith.constant 0 : index
    %11 = vector.load %arg2[%c64, %c0_10] : memref<96x2048xf32, #tpu.memory_space<vmem>>, vector<32x2048xf32>
    %cst_11 = arith.constant dense<0.000000e+00> : vector<8x2048xf32>
    %12 = tpu.matmul %5, %11, %cst_11 {dimension_numbers = #tpu.dot_dimension_numbers<[1], [0], [0], [1], [0, 0, 1, 1], [], []>} : vector<8x32xf32>, vector<32x2048xf32>, vector<8x2048xf32> -> vector<8x2048xf32>
    %13 = arith.addf %10, %12 : vector<8x2048xf32>
    %c0_12 = arith.constant 0 : index
    %c0_13 = arith.constant 0 : index
    %14 = vector.load %arg3[%c0_12, %c0_13] : memref<1x2048xf32, #tpu.memory_space<vmem>>, vector<1x2048xf32>
    %15 = vector.broadcast %14 : vector<1x2048xf32> to vector<8x2048xf32>
    %16 = arith.addf %13, %15 : vector<8x2048xf32>
    %cst_14 = arith.constant 0.000000e+00 : f32
    %17 = vector.broadcast %cst_14 : f32 to vector<8x2048xf32>
    %18 = arith.maximumf %16, %17 : vector<8x2048xf32>
    %c0_15 = arith.constant 0 : index
    %c0_16 = arith.constant 0 : index
    %c0_17 = arith.constant 0 : index
    %19 = vector.load %arg5[%c0_15, %c0_16, %c0_17] : memref<1x8x2048xf32, #tpu.memory_space<vmem>>, vector<1x8x2048xf32>
    %20 = vector.shape_cast %19 : vector<1x8x2048xf32> to vector<8x2048xf32>
    %21 = vector.shape_cast %18 : vector<8x2048xf32> to vector<1x8x2048xf32>
    tpu.vector_store %arg5[%c0_15, %c0_16, %c0_17], %21 {strides = array<i32>} : memref<1x8x2048xf32, #tpu.memory_space<vmem>>, vector<1x8x2048xf32>,
    %c0_18 = arith.constant 0 : index
    %c0_19 = arith.constant 0 : index
    %22 = vector.load %arg4[%c0_18, %c0_19] : memref<2048x128xf32, #tpu.memory_space<vmem>>, vector<2048x128xf32>
    %cst_20 = arith.constant dense<0.000000e+00> : vector<8x128xf32>
    %23 = tpu.matmul %18, %22, %cst_20 {dimension_numbers = #tpu.dot_dimension_numbers<[1], [0], [0], [1], [0, 0, 1, 1], [], []>} : vector<8x2048xf32>, vector<2048x128xf32>, vector<8x128xf32> -> vector<8x128xf32>
    %cst_21 = arith.constant 0.000000e+00 : f32
    %24 = vector.broadcast %cst_21 : f32 to vector<8x128xf32>
    %25 = arith.maximumf %23, %24 : vector<8x128xf32>
    %c0_22 = arith.constant 0 : index
    %c0_23 = arith.constant 0 : index
    %c0_24 = arith.constant 0 : index
    %26 = vector.load %arg6[%c0_22, %c0_23, %c0_24] : memref<1x8x128xf32, #tpu.memory_space<vmem>>, vector<1x8x128xf32>
    %27 = vector.shape_cast %26 : vector<1x8x128xf32> to vector<8x128xf32>
    %28 = vector.shape_cast %25 : vector<8x128xf32> to vector<1x8x128xf32>
    tpu.vector_store %arg6[%c0_22, %c0_23, %c0_24], %28 {strides = array<i32>} : memref<1x8x128xf32, #tpu.memory_space<vmem>>, vector<1x8x128xf32>,
    %cst_25 = arith.constant dense<0xFF800000> : vector<8xf32>
    %29 = vector.multi_reduction <maximumf>, %25, %cst_25 [1] : vector<8x128xf32> to vector<8xf32>
    %30 = vector.shape_cast %29 : vector<8xf32> to vector<8x1xf32>
    %c0_26 = arith.constant 0 : index
    %c0_27 = arith.constant 0 : index
    %c0_28 = arith.constant 0 : index
    %31 = vector.load %arg7[%c0_26, %c0_27, %c0_28] : memref<1x8x1xf32, #tpu.memory_space<vmem>>, vector<1x8x1xf32>
    %32 = vector.shape_cast %31 : vector<1x8x1xf32> to vector<8x1xf32>
    %33 = vector.shape_cast %30 : vector<8x1xf32> to vector<1x8x1xf32>
    tpu.vector_store %arg7[%c0_26, %c0_27, %c0_28], %33 {strides = array<i32>} : memref<1x8x1xf32, #tpu.memory_space<vmem>>, vector<1x8x1xf32>,
    return
  }
  func.func @transform_0(%arg0: i32) -> (i32, i32, i32) {
    %c0_i32 = arith.constant 0 : i32
    %c0_i32_0 = arith.constant 0 : i32
    %c0_i32_1 = arith.constant 0 : i32
    return %arg0, %c0_i32, %c0_i32_0 : i32, i32, i32
  }
  func.func @transform_1(%arg0: i32) -> (i32, i32) {
    %c0_i32 = arith.constant 0 : i32
    %c0_i32_0 = arith.constant 0 : i32
    %c0_i32_1 = arith.constant 0 : i32
    return %c0_i32, %c0_i32_0 : i32, i32
  }
  func.func @transform_2(%arg0: i32) -> (i32, i32) {
    %c0_i32 = arith.constant 0 : i32
    %c0_i32_0 = arith.constant 0 : i32
    %c0_i32_1 = arith.constant 0 : i32
    return %c0_i32, %c0_i32_0 : i32, i32
  }
  func.func @transform_3(%arg0: i32) -> (i32, i32) {
    %c0_i32 = arith.constant 0 : i32
    %c0_i32_0 = arith.constant 0 : i32
    %c0_i32_1 = arith.constant 0 : i32
    return %c0_i32, %c0_i32_0 : i32, i32
  }
  func.func @transform_4(%arg0: i32) -> (i32, i32, i32) {
    %c0_i32 = arith.constant 0 : i32
    %c0_i32_0 = arith.constant 0 : i32
    %c0_i32_1 = arith.constant 0 : i32
    return %arg0, %c0_i32, %c0_i32_0 : i32, i32, i32
  }
  func.func @transform_5(%arg0: i32) -> (i32, i32, i32) {
    %c0_i32 = arith.constant 0 : i32
    %c0_i32_0 = arith.constant 0 : i32
    %c0_i32_1 = arith.constant 0 : i32
    return %arg0, %c0_i32, %c0_i32_0 : i32, i32, i32
  }
  func.func @transform_6(%arg0: i32) -> (i32, i32, i32) {
    %c0_i32 = arith.constant 0 : i32
    %c0_i32_0 = arith.constant 0 : i32
    %c0_i32_1 = arith.constant 0 : i32
    return %arg0, %c0_i32, %c0_i32_0 : i32, i32, i32
  }
}

</mosaic_0001>

<llo_original>
// kernel: tpu_custom_call.1
$region0: #{tpu_custom_call.1}
  #allocation0 [shape = 'u32[]', space=smem, size = 0x4, offset = 0x4, fixed_abs, tag = 'smem constant byte address 0x4 - core index']
  #allocation1 [shape = 'u32[72,128]{1,0:T(1,128)}', space=vmem, size = 0x9000, scoped, tag = 'internal scratch']
  %s0 = inlined_call_operand.vmem [shape: f32[2,10,32], index: 0, kind: input, shape index: {}]
  %s1 = inlined_call_operand.hbm [shape: f32[96,2048], index: 1, kind: input, shape index: {}]
  %s2 = inlined_call_operand.vmem [shape: f32[1,2048], index: 2, kind: input, shape index: {}]
  %s3 = inlined_call_operand.hbm [shape: f32[2048,128], index: 3, kind: input, shape index: {}]
  %s4 = inlined_call_operand.hbm [shape: f32[2,8,2048], index: 4, kind: output, shape index: {0}]
  %s5 = inlined_call_operand.hbm [shape: f32[2,8,128], index: 5, kind: output, shape index: {1}]
  %s6 = inlined_call_operand.vmem [shape: f32[2,8,1], index: 6, kind: output, shape index: {2}]
  %7 = xla_tuple %s4, %s5, %s6
  %s8 = sld [smem:[#allocation0]]
  $region73: #{tpu_custom_call.1} parent=0
    _
  %s10 = ssub.s32 1, %s8
  %s11 = scalar_select 0, %s10, %s8
  $region1: #{tpu_custom_call.1} parent=0
    #allocation2 [shape = 'u8[786432]{0}', space=vmem, size = 0xc0000, scoped, tag = 'input window, operand 1, single buffered']
    #allocation3 [shape = 's32[2]{0}', space=sflag, size = 0x8, scoped, tag = 'scoped memory for tpu_custom_call.1']
    #allocation4 [shape = 's32[2]{0}', space=sflag, size = 0x8, scoped, tag = 'scoped memory for tpu_custom_call.1']
    #allocation5 [shape = 'u8[1048576]{0}', space=vmem, size = 0x100000, scoped, tag = 'input window, operand 3, single buffered']
    #allocation6 [shape = 's32[1]{0}', space=sflag, size = 0x4, scoped, tag = 'scoped memory for tpu_custom_call.1']
    #allocation7 [shape = 'u8[131072]{0}', space=vmem, size = 0x20000, scoped, tag = 'output window, operand 0']
    #allocation8 [shape = 'u8[8192]{0}', space=vmem, size = 0x2000, scoped, tag = 'output window, operand 1']
    #allocation9 [shape = 's32[2]{0}', space=sflag, size = 0x8, scoped, tag = 'scoped memory for tpu_custom_call.1']
    %12 = vsyncpa [#allocation3], 0
    %13 = vsyncpa [#allocation6], 0
    %14 = vsyncpa [#allocation4], 0
    %s15 = scalar_lea.sflag [#allocation4], 1
    %16 = vsyncpa %s15, 0
    %17 = vsyncpa [#allocation9], 0
    %s18 = scalar_lea.sflag [#allocation9], 1
    %19 = vsyncpa %s18, 0
    loop: start=0, step=1, limit=4
    $region2: #{tpu_custom_call.1} parent=1 // loop_pre_header
      _
    $region3: #{tpu_custom_call.1} parent=1 // loop_header
      %s21 = sphi 0, %s25
      %p22 = scmp.ge.s32.totalorder %s21, 4
      %s31 = sphi 0, %s33
      %s34 = sphi 0, %s31
      %s35 = sphi 0, %s34
      %s51 = sphi 0, %s35
      %s55 = sphi 0, %s55
      %s57 = sphi 0, %s55
      %s58 = sphi 0, %s57
      %s72 = sphi 0, %s58
      %s76 = sphi 0, %s76
      %s78 = sphi 0, %s76
      %s79 = sphi 0, %s78
      %s93 = sphi 0, %s79
      %s97 = sphi 0, %s97
      %s99 = sphi 0, %s97
      %s100 = sphi 0, %s99
      %s114 = sphi 0, %s100
      %s120 = sphi 0, %s122
      %s123 = sphi 0, %s120
      %s124 = sphi 0, %s123
      %s140 = sphi 0, %s124
      %s146 = sphi 0, %s148
      %s149 = sphi 0, %s146
      %s150 = sphi 0, %s149
      %s166 = sphi 0, %s150
      %s172 = sphi 0, %s174
      %s175 = sphi 0, %s172
      %s176 = sphi 0, %s175
      %s192 = sphi 0, %s176
    $region4: #{tpu_custom_call.1} parent=1 // loop_header_branch
      %24 = sbr.rel (%p22) target = $region8
    $region5: #{tpu_custom_call.1} parent=1 // loop_body
      %s26 = ssub.s32 %s21, 1
      %s27 = ssub.s32 %s21, 2
      %s28 = sadd.s32 %s21, 1
      %s29 = ssub.s32 %s21, %s28
      %p30 = scmp.eq.s32.totalorder %s29, 0
      %s32 = sadd.s32 %s31, 1
      %s33 = scalar_select %p30, %s31, %s32
      %p36 = pneg %p30
      %p37 = scmp.eq.s32.totalorder %s21, 1
      %p38 = por %p36, %p37
      %p39 = scmp.ne.s32.totalorder %s31, %s34
      %p40 = scmp.eq.s32.totalorder %s21, 0
      %p41 = por %p39, %p40
      %p42 = scmp.ne.s32.totalorder %s31, %s34
      %p43 = scmp.eq.s32.totalorder %s26, 1
      %p44 = por %p42, %p43
      %p45 = scmp.ne.s32.totalorder %s34, %s35
      %p46 = scmp.eq.s32.totalorder %s26, 0
      %p47 = por %p45, %p46
      %p48 = scmp.ne.s32.totalorder %s34, %s35
      %p49 = scmp.eq.s32.totalorder %s27, 1
      %p50 = por %p48, %p49
      %p52 = scmp.ne.s32.totalorder %s35, %s51
      %p53 = scmp.eq.s32.totalorder %s27, 0
      %p54 = por %p52, %p53
      %s56 = sadd.s32 %s55, 1
      %p59 = scmp.eq.s32.totalorder %s21, 1
      %p60 = scmp.ne.s32.totalorder %s55, %s57
      %p61 = scmp.eq.s32.totalorder %s21, 0
      %p62 = por %p60, %p61
      %p63 = scmp.ne.s32.totalorder %s55, %s57
      %p64 = scmp.eq.s32.totalorder %s26, 1
      %p65 = por %p63, %p64
      %p66 = scmp.ne.s32.totalorder %s57, %s58
      %p67 = scmp.eq.s32.totalorder %s26, 0
      %p68 = por %p66, %p67
      %p69 = scmp.ne.s32.totalorder %s57, %s58
      %p70 = scmp.eq.s32.totalorder %s27, 1
      %p71 = por %p69, %p70
      %p73 = scmp.ne.s32.totalorder %s58, %s72
      %p74 = scmp.eq.s32.totalorder %s27, 0
      %p75 = por %p73, %p74
      %s77 = sadd.s32 %s76, 1
      %p80 = scmp.eq.s32.totalorder %s21, 1
      %p81 = scmp.ne.s32.totalorder %s76, %s78
      %p82 = scmp.eq.s32.totalorder %s21, 0
      %p83 = por %p81, %p82
      %p84 = scmp.ne.s32.totalorder %s76, %s78
      %p85 = scmp.eq.s32.totalorder %s26, 1
      %p86 = por %p84, %p85
      %p87 = scmp.ne.s32.totalorder %s78, %s79
      %p88 = scmp.eq.s32.totalorder %s26, 0
      %p89 = por %p87, %p88
      %p90 = scmp.ne.s32.totalorder %s78, %s79
      %p91 = scmp.eq.s32.totalorder %s27, 1
      %p92 = por %p90, %p91
      %p94 = scmp.ne.s32.totalorder %s79, %s93
      %p95 = scmp.eq.s32.totalorder %s27, 0
      %p96 = por %p94, %p95
      %s98 = sadd.s32 %s97, 1
      %p101 = scmp.eq.s32.totalorder %s21, 1
      %p102 = scmp.ne.s32.totalorder %s97, %s99
      %p103 = scmp.eq.s32.totalorder %s21, 0
      %p104 = por %p102, %p103
      %p105 = scmp.ne.s32.totalorder %s97, %s99
      %p106 = scmp.eq.s32.totalorder %s26, 1
      %p107 = por %p105, %p106
      %p108 = scmp.ne.s32.totalorder %s99, %s100
      %p109 = scmp.eq.s32.totalorder %s26, 0
      %p110 = por %p108, %p109
      %p111 = scmp.ne.s32.totalorder %s99, %s100
      %p112 = scmp.eq.s32.totalorder %s27, 1
      %p113 = por %p111, %p112
      %p115 = scmp.ne.s32.totalorder %s100, %s114
      %p116 = scmp.eq.s32.totalorder %s27, 0
      %p117 = por %p115, %p116
      %s118 = ssub.s32 %s21, %s28
      %p119 = scmp.eq.s32.totalorder %s118, 0
      %s121 = sadd.s32 %s120, 1
      %s122 = scalar_select %p119, %s120, %s121
      %p125 = pneg %p119
      %p126 = scmp.eq.s32.totalorder %s21, 1
      %p127 = por %p125, %p126
      %p128 = scmp.ne.s32.totalorder %s120, %s123
      %p129 = scmp.eq.s32.totalorder %s21, 0
      %p130 = por %p128, %p129
      %p131 = scmp.ne.s32.totalorder %s120, %s123
      %p132 = scmp.eq.s32.totalorder %s26, 1
      %p133 = por %p131, %p132
      %p134 = scmp.ne.s32.totalorder %s123, %s124
      %p135 = scmp.eq.s32.totalorder %s26, 0
      %p136 = por %p134, %p135
      %p137 = scmp.ne.s32.totalorder %s123, %s124
      %p138 = scmp.eq.s32.totalorder %s27, 1
      %p139 = por %p137, %p138
      %p141 = scmp.ne.s32.totalorder %s124, %s140
      %p142 = scmp.eq.s32.totalorder %s27, 0
      %p143 = por %p141, %p142
      %s144 = ssub.s32 %s21, %s28
      %p145 = scmp.eq.s32.totalorder %s144, 0
      %s147 = sadd.s32 %s146, 1
      %s148 = scalar_select %p145, %s146, %s147
      %p151 = pneg %p145
      %p152 = scmp.eq.s32.totalorder %s21, 1
      %p153 = por %p151, %p152
      %p154 = scmp.ne.s32.totalorder %s146, %s149
      %p155 = scmp.eq.s32.totalorder %s21, 0
      %p156 = por %p154, %p155
      %p157 = scmp.ne.s32.totalorder %s146, %s149
      %p158 = scmp.eq.s32.totalorder %s26, 1
      %p159 = por %p157, %p158
      %p160 = scmp.ne.s32.totalorder %s149, %s150
      %p161 = scmp.eq.s32.totalorder %s26, 0
      %p162 = por %p160, %p161
      %p163 = scmp.ne.s32.totalorder %s149, %s150
      %p164 = scmp.eq.s32.totalorder %s27, 1
      %p165 = por %p163, %p164
      %p167 = scmp.ne.s32.totalorder %s150, %s166
      %p168 = scmp.eq.s32.totalorder %s27, 0
      %p169 = por %p167, %p168
      %s170 = ssub.s32 %s21, %s28
      %p171 = scmp.eq.s32.totalorder %s170, 0
      %s173 = sadd.s32 %s172, 1
      %s174 = scalar_select %p171, %s172, %s173
      %p177 = pneg %p171
      %p178 = scmp.eq.s32.totalorder %s21, 1
      %p179 = por %p177, %p178
      %p180 = scmp.ne.s32.totalorder %s172, %s175
      %p181 = scmp.eq.s32.totalorder %s21, 0
      %p182 = por %p180, %p181
      %p183 = scmp.ne.s32.totalorder %s172, %s175
      %p184 = scmp.eq.s32.totalorder %s26, 1
      %p185 = por %p183, %p184
      %p186 = scmp.ne.s32.totalorder %s175, %s176
      %p187 = scmp.eq.s32.totalorder %s26, 0
      %p188 = por %p186, %p187
      %p189 = scmp.ne.s32.totalorder %s175, %s176
      %p190 = scmp.eq.s32.totalorder %s27, 1
      %p191 = por %p189, %p190
      %p193 = scmp.ne.s32.totalorder %s176, %s192
      %p194 = scmp.eq.s32.totalorder %s27, 0
      %p195 = por %p193, %p194
      %p196 = scmp.le.s32.totalorder 1, %s21
      %p197 = scmp.lt.s32.totalorder %s21, 3
      %p198 = pnand %p196, %p197
      %p199 = pneg %p198
      // Predicated region
      $region9: #{tpu_custom_call.1} parent=5 // pred_check
        _
      $region10: #{tpu_custom_call.1} parent=5 // pred_check_branch
        %201 = sbr.rel (%p198) target = $region12
      $region11: #{tpu_custom_call.1} parent=5 // pred_region
        %s202 = ssub.s32 %s21, 1
        // Predicated region
        $region13: #{tpu_custom_call.1} parent=11 // pred_check
          %p203 = pneg %p68
        $region14: #{tpu_custom_call.1} parent=11 // pred_check_branch
          %205 = sbr.rel (%p203) target = $region16
        $region15: #{tpu_custom_call.1} parent=11 // pred_region
          %207 = vsyncadd [#allocation3], 0
          %s208 = sshll.u32 %s1, 4
          %s209 = int_to_ptr.hbm [resolvable:$true] %s208
          %s210 = sshll.u32 [#allocation2], 4
          %s211 = int_to_ptr.vmem [resolvable:$true] %s210
          %216 = dma.hbm_to_vmem [thread:$0]  %s209, 24576, %s211, [#allocation3], 2048, 2048, 128
        $region16: #{tpu_custom_call.1} parent=11 // pred_fallthru
          _
        // Predicated region
        $region17: #{tpu_custom_call.1} parent=11 // pred_check
          %p217 = pneg %p89
        $region18: #{tpu_custom_call.1} parent=11 // pred_check_branch
          %219 = sbr.rel (%p217) target = $region20
        $region19: #{tpu_custom_call.1} parent=11 // pred_region
          _
        $region20: #{tpu_custom_call.1} parent=11 // pred_fallthru
          _
        // Predicated region
        $region21: #{tpu_custom_call.1} parent=11 // pred_check
          %p220 = pneg %p110
        $region22: #{tpu_custom_call.1} parent=11 // pred_check_branch
          %222 = sbr.rel (%p220) target = $region24
        $region23: #{tpu_custom_call.1} parent=11 // pred_region
          %224 = vsyncadd [#allocation6], 0
          %s225 = sshll.u32 %s3, 4
          %s226 = int_to_ptr.hbm [resolvable:$true] %s225
          %s227 = sshll.u32 [#allocation5], 4
          %s228 = int_to_ptr.vmem [resolvable:$true] %s227
          %233 = dma.hbm_to_vmem [thread:$0]  %s226, 32768, %s228, [#allocation6], 128, 128, 8
        $region24: #{tpu_custom_call.1} parent=11 // pred_fallthru
          _
      $region12: #{tpu_custom_call.1} parent=5 // pred_fallthru
        _
      %p234 = scmp.lt.s32.totalorder %s21, 2
      // Predicated region
      $region25: #{tpu_custom_call.1} parent=5 // pred_check
        %p235 = pneg %p234
      $region26: #{tpu_custom_call.1} parent=5 // pred_check_branch
        %237 = sbr.rel (%p235) target = $region28
      $region27: #{tpu_custom_call.1} parent=5 // pred_region
        // Predicated region
        $region29: #{tpu_custom_call.1} parent=27 // pred_check
          %p238 = pneg %p41
        $region30: #{tpu_custom_call.1} parent=27 // pred_check_branch
          %240 = sbr.rel (%p238) target = $region32
        $region31: #{tpu_custom_call.1} parent=27 // pred_region
          %p241 = scmp.lt.s32.totalorder %s21, 1
          %s242 = scalar_select %p241, %s21, 1
          %s243 = smul.addr %s242, 2
          %s244 = smul.addr %s243, 8
          %s245 = scalar_lea.vmem %s0, %s244
        $region32: #{tpu_custom_call.1} parent=27 // pred_fallthru
          _
      $region28: #{tpu_custom_call.1} parent=5 // pred_fallthru
        _
      %p246 = scmp.le.s32.totalorder 1, %s21
      %p247 = scmp.lt.s32.totalorder %s21, 3
      %p248 = pnand %p246, %p247
      %p249 = pneg %p248
      // Predicated region
      $region33: #{tpu_custom_call.1} parent=5 // pred_check
        _
      $region34: #{tpu_custom_call.1} parent=5 // pred_check_branch
        %251 = sbr.rel (%p248) target = $region36
      $region35: #{tpu_custom_call.1} parent=5 // pred_region
        %s252 = ssub.s32 %s21, 1
        // Predicated region
        $region37: #{tpu_custom_call.1} parent=35 // pred_check
          %p253 = pneg %p68
        $region38: #{tpu_custom_call.1} parent=35 // pred_check_branch
          %255 = sbr.rel (%p253) target = $region40
        $region39: #{tpu_custom_call.1} parent=35 // pred_region
          %257 = dma.done [#allocation3], 24576
        $region40: #{tpu_custom_call.1} parent=35 // pred_fallthru
          _
        // Predicated region
        $region41: #{tpu_custom_call.1} parent=35 // pred_check
          %p258 = pneg %p110
        $region42: #{tpu_custom_call.1} parent=35 // pred_check_branch
          %260 = sbr.rel (%p258) target = $region44
        $region43: #{tpu_custom_call.1} parent=35 // pred_region
          %262 = dma.done [#allocation6], 32768
        $region44: #{tpu_custom_call.1} parent=35 // pred_fallthru
          _
        %p263 = scmp.lt.s32.totalorder %s26, 1
        %s264 = scalar_select %p263, %s26, 1
        %s265 = smul.addr %s264, 2
        %s266 = smul.addr %s265, 8
        %s267 = scalar_lea.vmem %s0, %s266
        %p268 = pneg %p47
        %p269 = pneg %p44
        %p270 = pneg %p68
        %p271 = pneg %p65
        %p272 = pneg %p89
        %p273 = pneg %p86
        %p274 = pneg %p110
        %p275 = pneg %p107
        %p276 = pneg %p136
        %p277 = pneg %p133
        %s278 = sand.u32 %s123, 1
        %s279 = scalar_lea.sflag [#allocation4], %s278
        %s280 = sand.u32 %s123, 1
        %s281 = smul.addr %s280, 128
        %s282 = scalar_lea.vmem [#allocation7], %s281
        %p283 = pneg %p162
        %p284 = pneg %p159
        %s285 = sand.u32 %s149, 1
        %s286 = scalar_lea.sflag [#allocation9], %s285
        %s287 = sand.u32 %s149, 1
        %s288 = smul.addr %s287, 8
        %s289 = scalar_lea.vmem [#allocation8], %s288
        %p290 = pneg %p188
        %p291 = pneg %p185
        %p292 = scmp.lt.s32.totalorder %s26, 1
        %s293 = scalar_select %p292, %s26, 1
        %s294 = smul.addr %s293, 8
        %s295 = scalar_lea.vmem %s6, %s294
        %p296 = scmp.lt.s32.totalorder %s26, 1
        %s297 = scalar_select %p296, %s26, 1
        %s298 = smul.addr %s297, 2
        %s299 = smul.addr %s298, 8
        %s300 = scalar_lea.vmem %s0, %s299
        %p301 = scmp.lt.s32.totalorder %s26, 1
        %s302 = scalar_select %p301, %s26, 1
        %s303 = smul.addr %s302, 8
        %s304 = scalar_lea.vmem %s6, %s303
        %v305 = vld [vmem:[%s300] sm:$0xff]
        %v306 = vld [vmem:[%s300 + $0x1] sm:$0xff]
        %v307 = vld [vmem:[%s300 + $0x2] sm:$0xff]
        %v308 = vld [vmem:[#allocation2] sm:$0xff]
        %v309 = vld [vmem:[#allocation2 + $0x8] sm:$0xff]
        %v310 = vld [vmem:[#allocation2 + $0x10] sm:$0xff]
        %v311 = vld [vmem:[#allocation2 + $0x18] sm:$0xff]
        %v312 = vld [vmem:[#allocation2 + $0x20] sm:$0xff]
        %v313 = vld [vmem:[#allocation2 + $0x28] sm:$0xff]
        %v314 = vld [vmem:[#allocation2 + $0x30] sm:$0xff]
        %v315 = vld [vmem:[#allocation2 + $0x38] sm:$0xff]
        %v316 = vld [vmem:[#allocation2 + $0x40] sm:$0xff]
        %v317 = vld [vmem:[#allocation2 + $0x48] sm:$0xff]
        %v318 = vld [vmem:[#allocation2 + $0x50] sm:$0xff]
        %v319 = vld [vmem:[#allocation2 + $0x58] sm:$0xff]
        %v320 = vld [vmem:[#allocation2 + $0x60] sm:$0xff]
        %v321 = vld [vmem:[#allocation2 + $0x68] sm:$0xff]
        %v322 = vld [vmem:[#allocation2 + $0x70] sm:$0xff]
        %v323 = vld [vmem:[#allocation2 + $0x78] sm:$0xff]
        %v324 = vld [vmem:[#allocation2 + $0x80] sm:$0xff]
        %v325 = vld [vmem:[#allocation2 + $0x88] sm:$0xff]
        %v326 = vld [vmem:[#allocation2 + $0x90] sm:$0xff]
        %v327 = vld [vmem:[#allocation2 + $0x98] sm:$0xff]
        %v328 = vld [vmem:[#allocation2 + $0xa0] sm:$0xff]
        %v329 = vld [vmem:[#allocation2 + $0xa8] sm:$0xff]
        %v330 = vld [vmem:[#allocation2 + $0xb0] sm:$0xff]
        %v331 = vld [vmem:[#allocation2 + $0xb8] sm:$0xff]
        %v332 = vld [vmem:[#allocation2 + $0xc0] sm:$0xff]
        %v333 = vld [vmem:[#allocation2 + $0xc8] sm:$0xff]
        %v334 = vld [vmem:[#allocation2 + $0xd0] sm:$0xff]
        %v335 = vld [vmem:[#allocation2 + $0xd8] sm:$0xff]
        %v336 = vld [vmem:[#allocation2 + $0xe0] sm:$0xff]
        %v337 = vld [vmem:[#allocation2 + $0xe8] sm:$0xff]
        %v338 = vld [vmem:[#allocation2 + $0xf0] sm:$0xff]
        %v339 = vld [vmem:[#allocation2 + $0xf8] sm:$0xff]
        %v340 = vld [vmem:[#allocation2 + $0x100] sm:$0xff]
        %v341 = vld [vmem:[#allocation2 + $0x108] sm:$0xff]
        %v342 = vld [vmem:[#allocation2 + $0x110] sm:$0xff]
        %v343 = vld [vmem:[#allocation2 + $0x118] sm:$0xff]
        %v344 = vld [vmem:[#allocation2 + $0x120] sm:$0xff]
        %v345 = vld [vmem:[#allocation2 + $0x128] sm:$0xff]
        %v346 = vld [vmem:[#allocation2 + $0x130] sm:$0xff]
        %v347 = vld [vmem:[#allocation2 + $0x138] sm:$0xff]
        %v348 = vld [vmem:[#allocation2 + $0x140] sm:$0xff]
        %v349 = vld [vmem:[#allocation2 + $0x148] sm:$0xff]
        %v350 = vld [vmem:[#allocation2 + $0x150] sm:$0xff]
        %v351 = vld [vmem:[#allocation2 + $0x158] sm:$0xff]
        %v352 = vld [vmem:[#allocation2 + $0x160] sm:$0xff]
        %v353 = vld [vmem:[#allocation2 + $0x168] sm:$0xff]
        %v354 = vld [vmem:[#allocation2 + $0x170] sm:$0xff]
        %v355 = vld [vmem:[#allocation2 + $0x178] sm:$0xff]
        %v356 = vld [vmem:[#allocation2 + $0x180] sm:$0xff]
        %v357 = vld [vmem:[#allocation2 + $0x188] sm:$0xff]
        %v358 = vld [vmem:[#allocation2 + $0x190] sm:$0xff]
        %v359 = vld [vmem:[#allocation2 + $0x198] sm:$0xff]
        %v360 = vld [vmem:[#allocation2 + $0x1a0] sm:$0xff]
        %v361 = vld [vmem:[#allocation2 + $0x1a8] sm:$0xff]
        %v362 = vld [vmem:[#allocation2 + $0x1b0] sm:$0xff]
        %v363 = vld [vmem:[#allocation2 + $0x1b8] sm:$0xff]
        %v364 = vld [vmem:[#allocation2 + $0x1c0] sm:$0xff]
        %v365 = vld [vmem:[#allocation2 + $0x1c8] sm:$0xff]
        %v366 = vld [vmem:[#allocation2 + $0x1d0] sm:$0xff]
        %v367 = vld [vmem:[#allocation2 + $0x1d8] sm:$0xff]
        %v368 = vld [vmem:[#allocation2 + $0x1e0] sm:$0xff]
        %v369 = vld [vmem:[#allocation2 + $0x1e8] sm:$0xff]
        %v370 = vld [vmem:[#allocation2 + $0x1f0] sm:$0xff]
        %v371 = vld [vmem:[#allocation2 + $0x1f8] sm:$0xff]
        %v372 = vld [vmem:[#allocation2 + $0x200] sm:$0xff]
        %v373 = vld [vmem:[#allocation2 + $0x208] sm:$0xff]
        %v374 = vld [vmem:[#allocation2 + $0x210] sm:$0xff]
        %v375 = vld [vmem:[#allocation2 + $0x218] sm:$0xff]
        %v376 = vld [vmem:[#allocation2 + $0x220] sm:$0xff]
        %v377 = vld [vmem:[#allocation2 + $0x228] sm:$0xff]
        %v378 = vld [vmem:[#allocation2 + $0x230] sm:$0xff]
        %v379 = vld [vmem:[#allocation2 + $0x238] sm:$0xff]
        %v380 = vld [vmem:[#allocation2 + $0x240] sm:$0xff]
        %v381 = vld [vmem:[#allocation2 + $0x248] sm:$0xff]
        %v382 = vld [vmem:[#allocation2 + $0x250] sm:$0xff]
        %v383 = vld [vmem:[#allocation2 + $0x258] sm:$0xff]
        %v384 = vld [vmem:[#allocation2 + $0x260] sm:$0xff]
        %v385 = vld [vmem:[#allocation2 + $0x268] sm:$0xff]
        %v386 = vld [vmem:[#allocation2 + $0x270] sm:$0xff]
        %v387 = vld [vmem:[#allocation2 + $0x278] sm:$0xff]
        %v388 = vld [vmem:[#allocation2 + $0x280] sm:$0xff]
        %v389 = vld [vmem:[#allocation2 + $0x288] sm:$0xff]
        %v390 = vld [vmem:[#allocation2 + $0x290] sm:$0xff]
        %v391 = vld [vmem:[#allocation2 + $0x298] sm:$0xff]
        %v392 = vld [vmem:[#allocation2 + $0x2a0] sm:$0xff]
        %v393 = vld [vmem:[#allocation2 + $0x2a8] sm:$0xff]
        %v394 = vld [vmem:[#allocation2 + $0x2b0] sm:$0xff]
        %v395 = vld [vmem:[#allocation2 + $0x2b8] sm:$0xff]
        %v396 = vld [vmem:[#allocation2 + $0x2c0] sm:$0xff]
        %v397 = vld [vmem:[#allocation2 + $0x2c8] sm:$0xff]
        %v398 = vld [vmem:[#allocation2 + $0x2d0] sm:$0xff]
        %v399 = vld [vmem:[#allocation2 + $0x2d8] sm:$0xff]
        %v400 = vld [vmem:[#allocation2 + $0x2e0] sm:$0xff]
        %v401 = vld [vmem:[#allocation2 + $0x2e8] sm:$0xff]
        %v402 = vld [vmem:[#allocation2 + $0x2f0] sm:$0xff]
        %v403 = vld [vmem:[#allocation2 + $0x2f8] sm:$0xff]
        %v404 = vld [vmem:[#allocation2 + $0x300] sm:$0xff]
        %v405 = vld [vmem:[#allocation2 + $0x308] sm:$0xff]
        %v406 = vld [vmem:[#allocation2 + $0x310] sm:$0xff]
        %v407 = vld [vmem:[#allocation2 + $0x318] sm:$0xff]
        %v408 = vld [vmem:[#allocation2 + $0x320] sm:$0xff]
        %v409 = vld [vmem:[#allocation2 + $0x328] sm:$0xff]
        %v410 = vld [vmem:[#allocation2 + $0x330] sm:$0xff]
        %v411 = vld [vmem:[#allocation2 + $0x338] sm:$0xff]
        %v412 = vld [vmem:[#allocation2 + $0x340] sm:$0xff]
        %v413 = vld [vmem:[#allocation2 + $0x348] sm:$0xff]
        %v414 = vld [vmem:[#allocation2 + $0x350] sm:$0xff]
        %v415 = vld [vmem:[#allocation2 + $0x358] sm:$0xff]
        %v416 = vld [vmem:[#allocation2 + $0x360] sm:$0xff]
        %v417 = vld [vmem:[#allocation2 + $0x368] sm:$0xff]
        %v418 = vld [vmem:[#allocation2 + $0x370] sm:$0xff]
        %v419 = vld [vmem:[#allocation2 + $0x378] sm:$0xff]
        %v420 = vld [vmem:[#allocation2 + $0x380] sm:$0xff]
        %v421 = vld [vmem:[#allocation2 + $0x388] sm:$0xff]
        %v422 = vld [vmem:[#allocation2 + $0x390] sm:$0xff]
        %v423 = vld [vmem:[#allocation2 + $0x398] sm:$0xff]
        %v424 = vld [vmem:[#allocation2 + $0x3a0] sm:$0xff]
        %v425 = vld [vmem:[#allocation2 + $0x3a8] sm:$0xff]
        %v426 = vld [vmem:[#allocation2 + $0x3b0] sm:$0xff]
        %v427 = vld [vmem:[#allocation2 + $0x3b8] sm:$0xff]
        %v428 = vld [vmem:[#allocation2 + $0x3c0] sm:$0xff]
        %v429 = vld [vmem:[#allocation2 + $0x3c8] sm:$0xff]
        %v430 = vld [vmem:[#allocation2 + $0x3d0] sm:$0xff]
        %v431 = vld [vmem:[#allocation2 + $0x3d8] sm:$0xff]
        %v432 = vld [vmem:[#allocation2 + $0x3e0] sm:$0xff]
        %v433 = vld [vmem:[#allocation2 + $0x3e8] sm:$0xff]
        %v434 = vld [vmem:[#allocation2 + $0x3f0] sm:$0xff]
        %v435 = vld [vmem:[#allocation2 + $0x3f8] sm:$0xff]
        %vm436 = vcmask 261120
        %v438 = vsel %vm436, %v306, 0
        %440 = vmatpush.msra.mxu0 0.0
        %441 = vmatpush.msra.mxu0 0.0
        %442 = vmatpush.msra.mxu0 0.0
        %443 = vmatpush.msra.mxu0 0.0
        %444 = vmatpush.msra.mxu0 0.0
        %445 = vmatpush.msra.mxu0 0.0
        %446 = vmatpush.msra.mxu0 0.0
        %447 = vmatpush.msra.mxu0 0.0
        %448 = vmatpush.msra.mxu0 0.0
        %449 = vmatpush.msra.mxu0 0.0
        %450 = vmatpush.msra.mxu0 0.0
        %451 = vmatpush.msra.mxu0 0.0
        %452 = vmatpush.msra.mxu0 %v420
        %453 = vmatpush.msra.mxu0 %v404
        %454 = vmatpush.msra.mxu0 %v388
        %455 = vmatpush.msra.mxu0 %v372
        %456 = vmatmul.f32.gmra.mxu0 %v438
        %v457 = vpop.f32.mrf.mxu0
        %v458 = vadd.f32 0.0, %v457
        %459 = vdwg.mxu0
        %460 = vmatpush.msra.mxu0 0.0
        %461 = vmatpush.msra.mxu0 0.0
        %462 = vmatpush.msra.mxu0 0.0
        %463 = vmatpush.msra.mxu0 0.0
        %464 = vmatpush.msra.mxu0 0.0
        %465 = vmatpush.msra.mxu0 0.0
        %466 = vmatpush.msra.mxu0 0.0
        %467 = vmatpush.msra.mxu0 0.0
        %468 = vmatpush.msra.mxu0 0.0
        %469 = vmatpush.msra.mxu0 0.0
        %470 = vmatpush.msra.mxu0 0.0
        %471 = vmatpush.msra.mxu0 0.0
        %472 = vmatpush.msra.mxu0 %v421
        %473 = vmatpush.msra.mxu0 %v405
        %474 = vmatpush.msra.mxu0 %v389
        %475 = vmatpush.msra.mxu0 %v373
        %476 = vmatmul.f32.gmra.mxu0 %v438
        %v477 = vpop.f32.mrf.mxu0
        %v478 = vadd.f32 0.0, %v477
        %479 = vdwg.mxu0
        %480 = vmatpush.msra.mxu0 0.0
        %481 = vmatpush.msra.mxu0 0.0
        %482 = vmatpush.msra.mxu0 0.0
        %483 = vmatpush.msra.mxu0 0.0
        %484 = vmatpush.msra.mxu0 0.0
        %485 = vmatpush.msra.mxu0 0.0
        %486 = vmatpush.msra.mxu0 0.0
        %487 = vmatpush.msra.mxu0 0.0
        %488 = vmatpush.msra.mxu0 0.0
        %489 = vmatpush.msra.mxu0 0.0
        %490 = vmatpush.msra.mxu0 0.0
        %491 = vmatpush.msra.mxu0 0.0
        %492 = vmatpush.msra.mxu0 %v422
        %493 = vmatpush.msra.mxu0 %v406
        %494 = vmatpush.msra.mxu0 %v390
        %495 = vmatpush.msra.mxu0 %v374
        %496 = vmatmul.f32.gmra.mxu0 %v438
        %v497 = vpop.f32.mrf.mxu0
        %v498 = vadd.f32 0.0, %v497
        %499 = vdwg.mxu0
        %500 = vmatpush.msra.mxu0 0.0
        %501 = vmatpush.msra.mxu0 0.0
        %502 = vmatpush.msra.mxu0 0.0
        %503 = vmatpush.msra.mxu0 0.0
        %504 = vmatpush.msra.mxu0 0.0
        %505 = vmatpush.msra.mxu0 0.0
        %506 = vmatpush.msra.mxu0 0.0
        %507 = vmatpush.msra.mxu0 0.0
        %508 = vmatpush.msra.mxu0 0.0
        %509 = vmatpush.msra.mxu0 0.0
        %510 = vmatpush.msra.mxu0 0.0
        %511 = vmatpush.msra.mxu0 0.0
        %512 = vmatpush.msra.mxu0 %v423
        %513 = vmatpush.msra.mxu0 %v407
        %514 = vmatpush.msra.mxu0 %v391
        %515 = vmatpush.msra.mxu0 %v375
        %516 = vmatmul.f32.gmra.mxu0 %v438
        %v517 = vpop.f32.mrf.mxu0
        %v518 = vadd.f32 0.0, %v517
        %519 = vdwg.mxu0
        %520 = vmatpush.msra.mxu0 0.0
        %521 = vmatpush.msra.mxu0 0.0
        %522 = vmatpush.msra.mxu0 0.0
        %523 = vmatpush.msra.mxu0 0.0
        %524 = vmatpush.msra.mxu0 0.0
        %525 = vmatpush.msra.mxu0 0.0
        %526 = vmatpush.msra.mxu0 0.0
        %527 = vmatpush.msra.mxu0 0.0
        %528 = vmatpush.msra.mxu0 0.0
        %529 = vmatpush.msra.mxu0 0.0
        %530 = vmatpush.msra.mxu0 0.0
        %531 = vmatpush.msra.mxu0 0.0
        %532 = vmatpush.msra.mxu0 %v424
        %533 = vmatpush.msra.mxu0 %v408
        %534 = vmatpush.msra.mxu0 %v392
        %535 = vmatpush.msra.mxu0 %v376
        %536 = vmatmul.f32.gmra.mxu0 %v438
        %v537 = vpop.f32.mrf.mxu0
        %v538 = vadd.f32 0.0, %v537
        %539 = vdwg.mxu0
        %540 = vmatpush.msra.mxu0 0.0
        %541 = vmatpush.msra.mxu0 0.0
        %542 = vmatpush.msra.mxu0 0.0
        %543 = vmatpush.msra.mxu0 0.0
        %544 = vmatpush.msra.mxu0 0.0
        %545 = vmatpush.msra.mxu0 0.0
        %546 = vmatpush.msra.mxu0 0.0
        %547 = vmatpush.msra.mxu0 0.0
        %548 = vmatpush.msra.mxu0 0.0
        %549 = vmatpush.msra.mxu0 0.0
        %550 = vmatpush.msra.mxu0 0.0
        %551 = vmatpush.msra.mxu0 0.0
        %552 = vmatpush.msra.mxu0 %v425
        %553 = vmatpush.msra.mxu0 %v409
        %554 = vmatpush.msra.mxu0 %v393
        %555 = vmatpush.msra.mxu0 %v377
        %556 = vmatmul.f32.gmra.mxu0 %v438
        %v557 = vpop.f32.mrf.mxu0
        %v558 = vadd.f32 0.0, %v557
        %559 = vdwg.mxu0
        %560 = vmatpush.msra.mxu0 0.0
        %561 = vmatpush.msra.mxu0 0.0
        %562 = vmatpush.msra.mxu0 0.0
        %563 = vmatpush.msra.mxu0 0.0
        %564 = vmatpush.msra.mxu0 0.0
        %565 = vmatpush.msra.mxu0 0.0
        %566 = vmatpush.msra.mxu0 0.0
        %567 = vmatpush.msra.mxu0 0.0
        %568 = vmatpush.msra.mxu0 0.0
        %569 = vmatpush.msra.mxu0 0.0
        %570 = vmatpush.msra.mxu0 0.0
        %571 = vmatpush.msra.mxu0 0.0
        %572 = vmatpush.msra.mxu0 %v426
        %573 = vmatpush.msra.mxu0 %v410
        %574 = vmatpush.msra.mxu0 %v394
        %575 = vmatpush.msra.mxu0 %v378
        %576 = vmatmul.f32.gmra.mxu0 %v438
        %v577 = vpop.f32.mrf.mxu0
        %v578 = vadd.f32 0.0, %v577
        %579 = vdwg.mxu0
        %580 = vmatpush.msra.mxu0 0.0
        %581 = vmatpush.msra.mxu0 0.0
        %582 = vmatpush.msra.mxu0 0.0
        %583 = vmatpush.msra.mxu0 0.0
        %584 = vmatpush.msra.mxu0 0.0
        %585 = vmatpush.msra.mxu0 0.0
        %586 = vmatpush.msra.mxu0 0.0
        %587 = vmatpush.msra.mxu0 0.0
        %588 = vmatpush.msra.mxu0 0.0
        %589 = vmatpush.msra.mxu0 0.0
        %590 = vmatpush.msra.mxu0 0.0
        %591 = vmatpush.msra.mxu0 0.0
        %592 = vmatpush.msra.mxu0 %v427
        %593 = vmatpush.msra.mxu0 %v411
        %594 = vmatpush.msra.mxu0 %v395
        %595 = vmatpush.msra.mxu0 %v379
        %596 = vmatmul.f32.gmra.mxu0 %v438
        %v597 = vpop.f32.mrf.mxu0
        %v598 = vadd.f32 0.0, %v597
        %599 = vdwg.mxu0
        %600 = vmatpush.msra.mxu0 0.0
        %601 = vmatpush.msra.mxu0 0.0
        %602 = vmatpush.msra.mxu0 0.0
        %603 = vmatpush.msra.mxu0 0.0
        %604 = vmatpush.msra.mxu0 0.0
        %605 = vmatpush.msra.mxu0 0.0
        %606 = vmatpush.msra.mxu0 0.0
        %607 = vmatpush.msra.mxu0 0.0
        %608 = vmatpush.msra.mxu0 0.0
        %609 = vmatpush.msra.mxu0 0.0
        %610 = vmatpush.msra.mxu0 0.0
        %611 = vmatpush.msra.mxu0 0.0
        %612 = vmatpush.msra.mxu0 %v428
        %613 = vmatpush.msra.mxu0 %v412
        %614 = vmatpush.msra.mxu0 %v396
        %615 = vmatpush.msra.mxu0 %v380
        %616 = vmatmul.f32.gmra.mxu0 %v438
        %v617 = vpop.f32.mrf.mxu0
        %v618 = vadd.f32 0.0, %v617
        %619 = vdwg.mxu0
        %620 = vmatpush.msra.mxu0 0.0
        %621 = vmatpush.msra.mxu0 0.0
        %622 = vmatpush.msra.mxu0 0.0
        %623 = vmatpush.msra.mxu0 0.0
        %624 = vmatpush.msra.mxu0 0.0
        %625 = vmatpush.msra.mxu0 0.0
        %626 = vmatpush.msra.mxu0 0.0
        %627 = vmatpush.msra.mxu0 0.0
        %628 = vmatpush.msra.mxu0 0.0
        %629 = vmatpush.msra.mxu0 0.0
        %630 = vmatpush.msra.mxu0 0.0
        %631 = vmatpush.msra.mxu0 0.0
        %632 = vmatpush.msra.mxu0 %v429
        %633 = vmatpush.msra.mxu0 %v413
        %634 = vmatpush.msra.mxu0 %v397
        %635 = vmatpush.msra.mxu0 %v381
        %636 = vmatmul.f32.gmra.mxu0 %v438
        %v637 = vpop.f32.mrf.mxu0
        %v638 = vadd.f32 0.0, %v637
        %639 = vdwg.mxu0
        %640 = vmatpush.msra.mxu0 0.0
        %641 = vmatpush.msra.mxu0 0.0
        %642 = vmatpush.msra.mxu0 0.0
        %643 = vmatpush.msra.mxu0 0.0
        %644 = vmatpush.msra.mxu0 0.0
        %645 = vmatpush.msra.mxu0 0.0
        %646 = vmatpush.msra.mxu0 0.0
        %647 = vmatpush.msra.mxu0 0.0
        %648 = vmatpush.msra.mxu0 0.0
        %649 = vmatpush.msra.mxu0 0.0
        %650 = vmatpush.msra.mxu0 0.0
        %651 = vmatpush.msra.mxu0 0.0
        %652 = vmatpush.msra.mxu0 %v430
        %653 = vmatpush.msra.mxu0 %v414
        %654 = vmatpush.msra.mxu0 %v398
        %655 = vmatpush.msra.mxu0 %v382
        %656 = vmatmul.f32.gmra.mxu0 %v438
        %v657 = vpop.f32.mrf.mxu0
        %v658 = vadd.f32 0.0, %v657
        %659 = vdwg.mxu0
        %660 = vmatpush.msra.mxu0 0.0
        %661 = vmatpush.msra.mxu0 0.0
        %662 = vmatpush.msra.mxu0 0.0
        %663 = vmatpush.msra.mxu0 0.0
        %664 = vmatpush.msra.mxu0 0.0
        %665 = vmatpush.msra.mxu0 0.0
        %666 = vmatpush.msra.mxu0 0.0
        %667 = vmatpush.msra.mxu0 0.0
        %668 = vmatpush.msra.mxu0 0.0
        %669 = vmatpush.msra.mxu0 0.0
        %670 = vmatpush.msra.mxu0 0.0
        %671 = vmatpush.msra.mxu0 0.0
        %672 = vmatpush.msra.mxu0 %v431
        %673 = vmatpush.msra.mxu0 %v415
        %674 = vmatpush.msra.mxu0 %v399
        %675 = vmatpush.msra.mxu0 %v383
        %676 = vmatmul.f32.gmra.mxu0 %v438
        %v677 = vpop.f32.mrf.mxu0
        %v678 = vadd.f32 0.0, %v677
        %679 = vdwg.mxu0
        %680 = vmatpush.msra.mxu0 0.0
        %681 = vmatpush.msra.mxu0 0.0
        %682 = vmatpush.msra.mxu0 0.0
        %683 = vmatpush.msra.mxu0 0.0
        %684 = vmatpush.msra.mxu0 0.0
        %685 = vmatpush.msra.mxu0 0.0
        %686 = vmatpush.msra.mxu0 0.0
        %687 = vmatpush.msra.mxu0 0.0
        %688 = vmatpush.msra.mxu0 0.0
        %689 = vmatpush.msra.mxu0 0.0
        %690 = vmatpush.msra.mxu0 0.0
        %691 = vmatpush.msra.mxu0 0.0
        %692 = vmatpush.msra.mxu0 %v432
        %693 = vmatpush.msra.mxu0 %v416
        %694 = vmatpush.msra.mxu0 %v400
        %695 = vmatpush.msra.mxu0 %v384
        %696 = vmatmul.f32.gmra.mxu0 %v438
        %v697 = vpop.f32.mrf.mxu0
        %v698 = vadd.f32 0.0, %v697
        %699 = vdwg.mxu0
        %700 = vmatpush.msra.mxu0 0.0
        %701 = vmatpush.msra.mxu0 0.0
        %702 = vmatpush.msra.mxu0 0.0
        %703 = vmatpush.msra.mxu0 0.0
        %704 = vmatpush.msra.mxu0 0.0
        %705 = vmatpush.msra.mxu0 0.0
        %706 = vmatpush.msra.mxu0 0.0
        %707 = vmatpush.msra.mxu0 0.0
        %708 = vmatpush.msra.mxu0 0.0
        %709 = vmatpush.msra.mxu0 0.0
        %710 = vmatpush.msra.mxu0 0.0
        %711 = vmatpush.msra.mxu0 0.0
        %712 = vmatpush.msra.mxu0 %v433
        %713 = vmatpush.msra.mxu0 %v417
        %714 = vmatpush.msra.mxu0 %v401
        %715 = vmatpush.msra.mxu0 %v385
        %716 = vmatmul.f32.gmra.mxu0 %v438
        %v717 = vpop.f32.mrf.mxu0
        %v718 = vadd.f32 0.0, %v717
        %719 = vdwg.mxu0
        %720 = vmatpush.msra.mxu0 0.0
        %721 = vmatpush.msra.mxu0 0.0
        %722 = vmatpush.msra.mxu0 0.0
        %723 = vmatpush.msra.mxu0 0.0
        %724 = vmatpush.msra.mxu0 0.0
        %725 = vmatpush.msra.mxu0 0.0
        %726 = vmatpush.msra.mxu0 0.0
        %727 = vmatpush.msra.mxu0 0.0
        %728 = vmatpush.msra.mxu0 0.0
        %729 = vmatpush.msra.mxu0 0.0
        %730 = vmatpush.msra.mxu0 0.0
        %731 = vmatpush.msra.mxu0 0.0
        %732 = vmatpush.msra.mxu0 %v434
        %733 = vmatpush.msra.mxu0 %v418
        %734 = vmatpush.msra.mxu0 %v402
        %735 = vmatpush.msra.mxu0 %v386
        %736 = vmatmul.f32.gmra.mxu0 %v438
        %v737 = vpop.f32.mrf.mxu0
        %v738 = vadd.f32 0.0, %v737
        %739 = vdwg.mxu0
        %740 = vmatpush.msra.mxu0 0.0
        %741 = vmatpush.msra.mxu0 0.0
        %742 = vmatpush.msra.mxu0 0.0
        %743 = vmatpush.msra.mxu0 0.0
        %744 = vmatpush.msra.mxu0 0.0
        %745 = vmatpush.msra.mxu0 0.0
        %746 = vmatpush.msra.mxu0 0.0
        %747 = vmatpush.msra.mxu0 0.0
        %748 = vmatpush.msra.mxu0 0.0
        %749 = vmatpush.msra.mxu0 0.0
        %750 = vmatpush.msra.mxu0 0.0
        %751 = vmatpush.msra.mxu0 0.0
        %752 = vmatpush.msra.mxu0 %v435
        %753 = vmatpush.msra.mxu0 %v419
        %754 = vmatpush.msra.mxu0 %v403
        %755 = vmatpush.msra.mxu0 %v387
        %756 = vmatmul.f32.gmra.mxu0 %v438
        %v757 = vpop.f32.mrf.mxu0
        %v758 = vadd.f32 0.0, %v757
        %759 = vdwg.mxu0
        %v761 = vsel %vm436, %v305, 0
        %763 = vmatpush.msra.mxu0 0.0
        %764 = vmatpush.msra.mxu0 0.0
        %765 = vmatpush.msra.mxu0 0.0
        %766 = vmatpush.msra.mxu0 0.0
        %767 = vmatpush.msra.mxu0 0.0
        %768 = vmatpush.msra.mxu0 0.0
        %769 = vmatpush.msra.mxu0 0.0
        %770 = vmatpush.msra.mxu0 0.0
        %771 = vmatpush.msra.mxu0 0.0
        %772 = vmatpush.msra.mxu0 0.0
        %773 = vmatpush.msra.mxu0 0.0
        %774 = vmatpush.msra.mxu0 0.0
        %775 = vmatpush.msra.mxu0 %v356
        %776 = vmatpush.msra.mxu0 %v340
        %777 = vmatpush.msra.mxu0 %v324
        %778 = vmatpush.msra.mxu0 %v308
        %779 = vmatmul.f32.gmra.mxu0 %v761
        %v780 = vpop.f32.mrf.mxu0
        %v781 = vadd.f32 %v458, %v780
        %782 = vdwg.mxu0
        %783 = vmatpush.msra.mxu0 0.0
        %784 = vmatpush.msra.mxu0 0.0
        %785 = vmatpush.msra.mxu0 0.0
        %786 = vmatpush.msra.mxu0 0.0
        %787 = vmatpush.msra.mxu0 0.0
        %788 = vmatpush.msra.mxu0 0.0
        %789 = vmatpush.msra.mxu0 0.0
        %790 = vmatpush.msra.mxu0 0.0
        %791 = vmatpush.msra.mxu0 0.0
        %792 = vmatpush.msra.mxu0 0.0
        %793 = vmatpush.msra.mxu0 0.0
        %794 = vmatpush.msra.mxu0 0.0
        %795 = vmatpush.msra.mxu0 %v357
        %796 = vmatpush.msra.mxu0 %v341
        %797 = vmatpush.msra.mxu0 %v325
        %798 = vmatpush.msra.mxu0 %v309
        %799 = vmatmul.f32.gmra.mxu0 %v761
        %v800 = vpop.f32.mrf.mxu0
        %v801 = vadd.f32 %v478, %v800
        %802 = vdwg.mxu0
        %803 = vmatpush.msra.mxu0 0.0
        %804 = vmatpush.msra.mxu0 0.0
        %805 = vmatpush.msra.mxu0 0.0
        %806 = vmatpush.msra.mxu0 0.0
        %807 = vmatpush.msra.mxu0 0.0
        %808 = vmatpush.msra.mxu0 0.0
        %809 = vmatpush.msra.mxu0 0.0
        %810 = vmatpush.msra.mxu0 0.0
        %811 = vmatpush.msra.mxu0 0.0
        %812 = vmatpush.msra.mxu0 0.0
        %813 = vmatpush.msra.mxu0 0.0
        %814 = vmatpush.msra.mxu0 0.0
        %815 = vmatpush.msra.mxu0 %v358
        %816 = vmatpush.msra.mxu0 %v342
        %817 = vmatpush.msra.mxu0 %v326
        %818 = vmatpush.msra.mxu0 %v310
        %819 = vmatmul.f32.gmra.mxu0 %v761
        %v820 = vpop.f32.mrf.mxu0
        %v821 = vadd.f32 %v498, %v820
        %822 = vdwg.mxu0
        %823 = vmatpush.msra.mxu0 0.0
        %824 = vmatpush.msra.mxu0 0.0
        %825 = vmatpush.msra.mxu0 0.0
        %826 = vmatpush.msra.mxu0 0.0
        %827 = vmatpush.msra.mxu0 0.0
        %828 = vmatpush.msra.mxu0 0.0
        %829 = vmatpush.msra.mxu0 0.0
        %830 = vmatpush.msra.mxu0 0.0
        %831 = vmatpush.msra.mxu0 0.0
        %832 = vmatpush.msra.mxu0 0.0
        %833 = vmatpush.msra.mxu0 0.0
        %834 = vmatpush.msra.mxu0 0.0
        %835 = vmatpush.msra.mxu0 %v359
        %836 = vmatpush.msra.mxu0 %v343
        %837 = vmatpush.msra.mxu0 %v327
        %838 = vmatpush.msra.mxu0 %v311
        %839 = vmatmul.f32.gmra.mxu0 %v761
        %v840 = vpop.f32.mrf.mxu0
        %v841 = vadd.f32 %v518, %v840
        %842 = vdwg.mxu0
        %843 = vmatpush.msra.mxu0 0.0
        %844 = vmatpush.msra.mxu0 0.0
        %845 = vmatpush.msra.mxu0 0.0
        %846 = vmatpush.msra.mxu0 0.0
        %847 = vmatpush.msra.mxu0 0.0
        %848 = vmatpush.msra.mxu0 0.0
        %849 = vmatpush.msra.mxu0 0.0
        %850 = vmatpush.msra.mxu0 0.0
        %851 = vmatpush.msra.mxu0 0.0
        %852 = vmatpush.msra.mxu0 0.0
        %853 = vmatpush.msra.mxu0 0.0
        %854 = vmatpush.msra.mxu0 0.0
        %855 = vmatpush.msra.mxu0 %v360
        %856 = vmatpush.msra.mxu0 %v344
        %857 = vmatpush.msra.mxu0 %v328
        %858 = vmatpush.msra.mxu0 %v312
        %859 = vmatmul.f32.gmra.mxu0 %v761
        %v860 = vpop.f32.mrf.mxu0
        %v861 = vadd.f32 %v538, %v860
        %862 = vdwg.mxu0
        %863 = vmatpush.msra.mxu0 0.0
        %864 = vmatpush.msra.mxu0 0.0
        %865 = vmatpush.msra.mxu0 0.0
        %866 = vmatpush.msra.mxu0 0.0
        %867 = vmatpush.msra.mxu0 0.0
        %868 = vmatpush.msra.mxu0 0.0
        %869 = vmatpush.msra.mxu0 0.0
        %870 = vmatpush.msra.mxu0 0.0
        %871 = vmatpush.msra.mxu0 0.0
        %872 = vmatpush.msra.mxu0 0.0
        %873 = vmatpush.msra.mxu0 0.0
        %874 = vmatpush.msra.mxu0 0.0
        %875 = vmatpush.msra.mxu0 %v361
        %876 = vmatpush.msra.mxu0 %v345
        %877 = vmatpush.msra.mxu0 %v329
        %878 = vmatpush.msra.mxu0 %v313
        %879 = vmatmul.f32.gmra.mxu0 %v761
        %v880 = vpop.f32.mrf.mxu0
        %v881 = vadd.f32 %v558, %v880
        %882 = vdwg.mxu0
        %883 = vmatpush.msra.mxu0 0.0
        %884 = vmatpush.msra.mxu0 0.0
        %885 = vmatpush.msra.mxu0 0.0
        %886 = vmatpush.msra.mxu0 0.0
        %887 = vmatpush.msra.mxu0 0.0
        %888 = vmatpush.msra.mxu0 0.0
        %889 = vmatpush.msra.mxu0 0.0
        %890 = vmatpush.msra.mxu0 0.0
        %891 = vmatpush.msra.mxu0 0.0
        %892 = vmatpush.msra.mxu0 0.0
        %893 = vmatpush.msra.mxu0 0.0
        %894 = vmatpush.msra.mxu0 0.0
        %895 = vmatpush.msra.mxu0 %v362
        %896 = vmatpush.msra.mxu0 %v346
        %897 = vmatpush.msra.mxu0 %v330
        %898 = vmatpush.msra.mxu0 %v314
        %899 = vmatmul.f32.gmra.mxu0 %v761
        %v900 = vpop.f32.mrf.mxu0
        %v901 = vadd.f32 %v578, %v900
        %902 = vdwg.mxu0
        %903 = vmatpush.msra.mxu0 0.0
        %904 = vmatpush.msra.mxu0 0.0
        %905 = vmatpush.msra.mxu0 0.0
        %906 = vmatpush.msra.mxu0 0.0
        %907 = vmatpush.msra.mxu0 0.0
        %908 = vmatpush.msra.mxu0 0.0
        %909 = vmatpush.msra.mxu0 0.0
        %910 = vmatpush.msra.mxu0 0.0
        %911 = vmatpush.msra.mxu0 0.0
        %912 = vmatpush.msra.mxu0 0.0
        %913 = vmatpush.msra.mxu0 0.0
        %914 = vmatpush.msra.mxu0 0.0
        %915 = vmatpush.msra.mxu0 %v363
        %916 = vmatpush.msra.mxu0 %v347
        %917 = vmatpush.msra.mxu0 %v331
        %918 = vmatpush.msra.mxu0 %v315
        %919 = vmatmul.f32.gmra.mxu0 %v761
        %v920 = vpop.f32.mrf.mxu0
        %v921 = vadd.f32 %v598, %v920
        %922 = vdwg.mxu0
        %923 = vmatpush.msra.mxu0 0.0
        %924 = vmatpush.msra.mxu0 0.0
        %925 = vmatpush.msra.mxu0 0.0
        %926 = vmatpush.msra.mxu0 0.0
        %927 = vmatpush.msra.mxu0 0.0
        %928 = vmatpush.msra.mxu0 0.0
        %929 = vmatpush.msra.mxu0 0.0
        %930 = vmatpush.msra.mxu0 0.0
        %931 = vmatpush.msra.mxu0 0.0
        %932 = vmatpush.msra.mxu0 0.0
        %933 = vmatpush.msra.mxu0 0.0
        %934 = vmatpush.msra.mxu0 0.0
        %935 = vmatpush.msra.mxu0 %v364
        %936 = vmatpush.msra.mxu0 %v348
        %937 = vmatpush.msra.mxu0 %v332
        %938 = vmatpush.msra.mxu0 %v316
        %939 = vmatmul.f32.gmra.mxu0 %v761
        %v940 = vpop.f32.mrf.mxu0
        %v941 = vadd.f32 %v618, %v940
        %942 = vdwg.mxu0
        %943 = vmatpush.msra.mxu0 0.0
        %944 = vmatpush.msra.mxu0 0.0
        %945 = vmatpush.msra.mxu0 0.0
        %946 = vmatpush.msra.mxu0 0.0
        %947 = vmatpush.msra.mxu0 0.0
        %948 = vmatpush.msra.mxu0 0.0
        %949 = vmatpush.msra.mxu0 0.0
        %950 = vmatpush.msra.mxu0 0.0
        %951 = vmatpush.msra.mxu0 0.0
        %952 = vmatpush.msra.mxu0 0.0
        %953 = vmatpush.msra.mxu0 0.0
        %954 = vmatpush.msra.mxu0 0.0
        %955 = vmatpush.msra.mxu0 %v365
        %956 = vmatpush.msra.mxu0 %v349
        %957 = vmatpush.msra.mxu0 %v333
        %958 = vmatpush.msra.mxu0 %v317
        %959 = vmatmul.f32.gmra.mxu0 %v761
        %v960 = vpop.f32.mrf.mxu0
        %v961 = vadd.f32 %v638, %v960
        %962 = vdwg.mxu0
        %963 = vmatpush.msra.mxu0 0.0
        %964 = vmatpush.msra.mxu0 0.0
        %965 = vmatpush.msra.mxu0 0.0
        %966 = vmatpush.msra.mxu0 0.0
        %967 = vmatpush.msra.mxu0 0.0
        %968 = vmatpush.msra.mxu0 0.0
        %969 = vmatpush.msra.mxu0 0.0
        %970 = vmatpush.msra.mxu0 0.0
        %971 = vmatpush.msra.mxu0 0.0
        %972 = vmatpush.msra.mxu0 0.0
        %973 = vmatpush.msra.mxu0 0.0
        %974 = vmatpush.msra.mxu0 0.0
        %975 = vmatpush.msra.mxu0 %v366
        %976 = vmatpush.msra.mxu0 %v350
        %977 = vmatpush.msra.mxu0 %v334
        %978 = vmatpush.msra.mxu0 %v318
        %979 = vmatmul.f32.gmra.mxu0 %v761
        %v980 = vpop.f32.mrf.mxu0
        %v981 = vadd.f32 %v658, %v980
        %982 = vdwg.mxu0
        %983 = vmatpush.msra.mxu0 0.0
        %984 = vmatpush.msra.mxu0 0.0
        %985 = vmatpush.msra.mxu0 0.0
        %986 = vmatpush.msra.mxu0 0.0
        %987 = vmatpush.msra.mxu0 0.0
        %988 = vmatpush.msra.mxu0 0.0
        %989 = vmatpush.msra.mxu0 0.0
        %990 = vmatpush.msra.mxu0 0.0
        %991 = vmatpush.msra.mxu0 0.0
        %992 = vmatpush.msra.mxu0 0.0
        %993 = vmatpush.msra.mxu0 0.0
        %994 = vmatpush.msra.mxu0 0.0
        %995 = vmatpush.msra.mxu0 %v367
        %996 = vmatpush.msra.mxu0 %v351
        %997 = vmatpush.msra.mxu0 %v335
        %998 = vmatpush.msra.mxu0 %v319
        %999 = vmatmul.f32.gmra.mxu0 %v761
        %v1000 = vpop.f32.mrf.mxu0
        %v1001 = vadd.f32 %v678, %v1000
        %1002 = vdwg.mxu0
        %1003 = vmatpush.msra.mxu0 0.0
        %1004 = vmatpush.msra.mxu0 0.0
        %1005 = vmatpush.msra.mxu0 0.0
        %1006 = vmatpush.msra.mxu0 0.0
        %1007 = vmatpush.msra.mxu0 0.0
        %1008 = vmatpush.msra.mxu0 0.0
        %1009 = vmatpush.msra.mxu0 0.0
        %1010 = vmatpush.msra.mxu0 0.0
        %1011 = vmatpush.msra.mxu0 0.0
        %1012 = vmatpush.msra.mxu0 0.0
        %1013 = vmatpush.msra.mxu0 0.0
        %1014 = vmatpush.msra.mxu0 0.0
        %1015 = vmatpush.msra.mxu0 %v368
        %1016 = vmatpush.msra.mxu0 %v352
        %1017 = vmatpush.msra.mxu0 %v336
        %1018 = vmatpush.msra.mxu0 %v320
        %1019 = vmatmul.f32.gmra.mxu0 %v761
        %v1020 = vpop.f32.mrf.mxu0
        %v1021 = vadd.f32 %v698, %v1020
        %1022 = vdwg.mxu0
        %1023 = vmatpush.msra.mxu0 0.0
        %1024 = vmatpush.msra.mxu0 0.0
        %1025 = vmatpush.msra.mxu0 0.0
        %1026 = vmatpush.msra.mxu0 0.0
        %1027 = vmatpush.msra.mxu0 0.0
        %1028 = vmatpush.msra.mxu0 0.0
        %1029 = vmatpush.msra.mxu0 0.0
        %1030 = vmatpush.msra.mxu0 0.0
        %1031 = vmatpush.msra.mxu0 0.0
        %1032 = vmatpush.msra.mxu0 0.0
        %1033 = vmatpush.msra.mxu0 0.0
        %1034 = vmatpush.msra.mxu0 0.0
        %1035 = vmatpush.msra.mxu0 %v369
        %1036 = vmatpush.msra.mxu0 %v353
        %1037 = vmatpush.msra.mxu0 %v337
        %1038 = vmatpush.msra.mxu0 %v321
        %1039 = vmatmul.f32.gmra.mxu0 %v761
        %v1040 = vpop.f32.mrf.mxu0
        %v1041 = vadd.f32 %v718, %v1040
        %1042 = vdwg.mxu0
        %1043 = vmatpush.msra.mxu0 0.0
        %1044 = vmatpush.msra.mxu0 0.0
        %1045 = vmatpush.msra.mxu0 0.0
        %1046 = vmatpush.msra.mxu0 0.0
        %1047 = vmatpush.msra.mxu0 0.0
        %1048 = vmatpush.msra.mxu0 0.0
        %1049 = vmatpush.msra.mxu0 0.0
        %1050 = vmatpush.msra.mxu0 0.0
        %1051 = vmatpush.msra.mxu0 0.0
        %1052 = vmatpush.msra.mxu0 0.0
        %1053 = vmatpush.msra.mxu0 0.0
        %1054 = vmatpush.msra.mxu0 0.0
        %1055 = vmatpush.msra.mxu0 %v370
        %1056 = vmatpush.msra.mxu0 %v354
        %1057 = vmatpush.msra.mxu0 %v338
        %1058 = vmatpush.msra.mxu0 %v322
        %1059 = vmatmul.f32.gmra.mxu0 %v761
        %v1060 = vpop.f32.mrf.mxu0
        %v1061 = vadd.f32 %v738, %v1060
        %1062 = vdwg.mxu0
        %1063 = vmatpush.msra.mxu0 0.0
        %1064 = vmatpush.msra.mxu0 0.0
        %1065 = vmatpush.msra.mxu0 0.0
        %1066 = vmatpush.msra.mxu0 0.0
        %1067 = vmatpush.msra.mxu0 0.0
        %1068 = vmatpush.msra.mxu0 0.0
        %1069 = vmatpush.msra.mxu0 0.0
        %1070 = vmatpush.msra.mxu0 0.0
        %1071 = vmatpush.msra.mxu0 0.0
        %1072 = vmatpush.msra.mxu0 0.0
        %1073 = vmatpush.msra.mxu0 0.0
        %1074 = vmatpush.msra.mxu0 0.0
        %1075 = vmatpush.msra.mxu0 %v371
        %1076 = vmatpush.msra.mxu0 %v355
        %1077 = vmatpush.msra.mxu0 %v339
        %1078 = vmatpush.msra.mxu0 %v323
        %1079 = vmatmul.f32.gmra.mxu0 %v761
        %v1080 = vpop.f32.mrf.mxu0
        %v1081 = vadd.f32 %v758, %v1080
        %1082 = vdwg.mxu0
        %v1083 = vld [vmem:[#allocation2 + $0x400] sm:$0xff]
        %v1084 = vld [vmem:[#allocation2 + $0x408] sm:$0xff]
        %v1085 = vld [vmem:[#allocation2 + $0x410] sm:$0xff]
        %v1086 = vld [vmem:[#allocation2 + $0x418] sm:$0xff]
        %v1087 = vld [vmem:[#allocation2 + $0x420] sm:$0xff]
        %v1088 = vld [vmem:[#allocation2 + $0x428] sm:$0xff]
        %v1089 = vld [vmem:[#allocation2 + $0x430] sm:$0xff]
        %v1090 = vld [vmem:[#allocation2 + $0x438] sm:$0xff]
        %v1091 = vld [vmem:[#allocation2 + $0x440] sm:$0xff]
        %v1092 = vld [vmem:[#allocation2 + $0x448] sm:$0xff]
        %v1093 = vld [vmem:[#allocation2 + $0x450] sm:$0xff]
        %v1094 = vld [vmem:[#allocation2 + $0x458] sm:$0xff]
        %v1095 = vld [vmem:[#allocation2 + $0x460] sm:$0xff]
        %v1096 = vld [vmem:[#allocation2 + $0x468] sm:$0xff]
        %v1097 = vld [vmem:[#allocation2 + $0x470] sm:$0xff]
        %v1098 = vld [vmem:[#allocation2 + $0x478] sm:$0xff]
        %v1099 = vld [vmem:[#allocation2 + $0x480] sm:$0xff]
        %v1100 = vld [vmem:[#allocation2 + $0x488] sm:$0xff]
        %v1101 = vld [vmem:[#allocation2 + $0x490] sm:$0xff]
        %v1102 = vld [vmem:[#allocation2 + $0x498] sm:$0xff]
        %v1103 = vld [vmem:[#allocation2 + $0x4a0] sm:$0xff]
        %v1104 = vld [vmem:[#allocation2 + $0x4a8] sm:$0xff]
        %v1105 = vld [vmem:[#allocation2 + $0x4b0] sm:$0xff]
        %v1106 = vld [vmem:[#allocation2 + $0x4b8] sm:$0xff]
        %v1107 = vld [vmem:[#allocation2 + $0x4c0] sm:$0xff]
        %v1108 = vld [vmem:[#allocation2 + $0x4c8] sm:$0xff]
        %v1109 = vld [vmem:[#allocation2 + $0x4d0] sm:$0xff]
        %v1110 = vld [vmem:[#allocation2 + $0x4d8] sm:$0xff]
        %v1111 = vld [vmem:[#allocation2 + $0x4e0] sm:$0xff]
        %v1112 = vld [vmem:[#allocation2 + $0x4e8] sm:$0xff]
        %v1113 = vld [vmem:[#allocation2 + $0x4f0] sm:$0xff]
        %v1114 = vld [vmem:[#allocation2 + $0x4f8] sm:$0xff]
        %v1115 = vld [vmem:[#allocation2 + $0x500] sm:$0xff]
        %v1116 = vld [vmem:[#allocation2 + $0x508] sm:$0xff]
        %v1117 = vld [vmem:[#allocation2 + $0x510] sm:$0xff]
        %v1118 = vld [vmem:[#allocation2 + $0x518] sm:$0xff]
        %v1119 = vld [vmem:[#allocation2 + $0x520] sm:$0xff]
        %v1120 = vld [vmem:[#allocation2 + $0x528] sm:$0xff]
        %v1121 = vld [vmem:[#allocation2 + $0x530] sm:$0xff]
        %v1122 = vld [vmem:[#allocation2 + $0x538] sm:$0xff]
        %v1123 = vld [vmem:[#allocation2 + $0x540] sm:$0xff]
        %v1124 = vld [vmem:[#allocation2 + $0x548] sm:$0xff]
        %v1125 = vld [vmem:[#allocation2 + $0x550] sm:$0xff]
        %v1126 = vld [vmem:[#allocation2 + $0x558] sm:$0xff]
        %v1127 = vld [vmem:[#allocation2 + $0x560] sm:$0xff]
        %v1128 = vld [vmem:[#allocation2 + $0x568] sm:$0xff]
        %v1129 = vld [vmem:[#allocation2 + $0x570] sm:$0xff]
        %v1130 = vld [vmem:[#allocation2 + $0x578] sm:$0xff]
        %v1131 = vld [vmem:[#allocation2 + $0x580] sm:$0xff]
        %v1132 = vld [vmem:[#allocation2 + $0x588] sm:$0xff]
        %v1133 = vld [vmem:[#allocation2 + $0x590] sm:$0xff]
        %v1134 = vld [vmem:[#allocation2 + $0x598] sm:$0xff]
        %v1135 = vld [vmem:[#allocation2 + $0x5a0] sm:$0xff]
        %v1136 = vld [vmem:[#allocation2 + $0x5a8] sm:$0xff]
        %v1137 = vld [vmem:[#allocation2 + $0x5b0] sm:$0xff]
        %v1138 = vld [vmem:[#allocation2 + $0x5b8] sm:$0xff]
        %v1139 = vld [vmem:[#allocation2 + $0x5c0] sm:$0xff]
        %v1140 = vld [vmem:[#allocation2 + $0x5c8] sm:$0xff]
        %v1141 = vld [vmem:[#allocation2 + $0x5d0] sm:$0xff]
        %v1142 = vld [vmem:[#allocation2 + $0x5d8] sm:$0xff]
        %v1143 = vld [vmem:[#allocation2 + $0x5e0] sm:$0xff]
        %v1144 = vld [vmem:[#allocation2 + $0x5e8] sm:$0xff]
        %v1145 = vld [vmem:[#allocation2 + $0x5f0] sm:$0xff]
        %v1146 = vld [vmem:[#allocation2 + $0x5f8] sm:$0xff]
        %v1148 = vsel %vm436, %v307, 0
        %1150 = vmatpush.msra.mxu0 0.0
        %1151 = vmatpush.msra.mxu0 0.0
        %1152 = vmatpush.msra.mxu0 0.0
        %1153 = vmatpush.msra.mxu0 0.0
        %1154 = vmatpush.msra.mxu0 0.0
        %1155 = vmatpush.msra.mxu0 0.0
        %1156 = vmatpush.msra.mxu0 0.0
        %1157 = vmatpush.msra.mxu0 0.0
        %1158 = vmatpush.msra.mxu0 0.0
        %1159 = vmatpush.msra.mxu0 0.0
        %1160 = vmatpush.msra.mxu0 0.0
        %1161 = vmatpush.msra.mxu0 0.0
        %1162 = vmatpush.msra.mxu0 %v1131
        %1163 = vmatpush.msra.mxu0 %v1115
        %1164 = vmatpush.msra.mxu0 %v1099
        %1165 = vmatpush.msra.mxu0 %v1083
        %1166 = vmatmul.f32.gmra.mxu0 %v1148
        %v1167 = vpop.f32.mrf.mxu0
        %v1168 = vadd.f32 0.0, %v1167
        %1169 = vdwg.mxu0
        %1170 = vmatpush.msra.mxu0 0.0
        %1171 = vmatpush.msra.mxu0 0.0
        %1172 = vmatpush.msra.mxu0 0.0
        %1173 = vmatpush.msra.mxu0 0.0
        %1174 = vmatpush.msra.mxu0 0.0
        %1175 = vmatpush.msra.mxu0 0.0
        %1176 = vmatpush.msra.mxu0 0.0
        %1177 = vmatpush.msra.mxu0 0.0
        %1178 = vmatpush.msra.mxu0 0.0
        %1179 = vmatpush.msra.mxu0 0.0
        %1180 = vmatpush.msra.mxu0 0.0
        %1181 = vmatpush.msra.mxu0 0.0
        %1182 = vmatpush.msra.mxu0 %v1132
        %1183 = vmatpush.msra.mxu0 %v1116
        %1184 = vmatpush.msra.mxu0 %v1100
        %1185 = vmatpush.msra.mxu0 %v1084
        %1186 = vmatmul.f32.gmra.mxu0 %v1148
        %v1187 = vpop.f32.mrf.mxu0
        %v1188 = vadd.f32 0.0, %v1187
        %1189 = vdwg.mxu0
        %1190 = vmatpush.msra.mxu0 0.0
        %1191 = vmatpush.msra.mxu0 0.0
        %1192 = vmatpush.msra.mxu0 0.0
        %1193 = vmatpush.msra.mxu0 0.0
        %1194 = vmatpush.msra.mxu0 0.0
        %1195 = vmatpush.msra.mxu0 0.0
        %1196 = vmatpush.msra.mxu0 0.0
        %1197 = vmatpush.msra.mxu0 0.0
        %1198 = vmatpush.msra.mxu0 0.0
        %1199 = vmatpush.msra.mxu0 0.0
        %1200 = vmatpush.msra.mxu0 0.0
        %1201 = vmatpush.msra.mxu0 0.0
        %1202 = vmatpush.msra.mxu0 %v1133
        %1203 = vmatpush.msra.mxu0 %v1117
        %1204 = vmatpush.msra.mxu0 %v1101
        %1205 = vmatpush.msra.mxu0 %v1085
        %1206 = vmatmul.f32.gmra.mxu0 %v1148
        %v1207 = vpop.f32.mrf.mxu0
        %v1208 = vadd.f32 0.0, %v1207
        %1209 = vdwg.mxu0
        %1210 = vmatpush.msra.mxu0 0.0
        %1211 = vmatpush.msra.mxu0 0.0
        %1212 = vmatpush.msra.mxu0 0.0
        %1213 = vmatpush.msra.mxu0 0.0
        %1214 = vmatpush.msra.mxu0 0.0
        %1215 = vmatpush.msra.mxu0 0.0
        %1216 = vmatpush.msra.mxu0 0.0
        %1217 = vmatpush.msra.mxu0 0.0
        %1218 = vmatpush.msra.mxu0 0.0
        %1219 = vmatpush.msra.mxu0 0.0
        %1220 = vmatpush.msra.mxu0 0.0
        %1221 = vmatpush.msra.mxu0 0.0
        %1222 = vmatpush.msra.mxu0 %v1134
        %1223 = vmatpush.msra.mxu0 %v1118
        %1224 = vmatpush.msra.mxu0 %v1102
        %1225 = vmatpush.msra.mxu0 %v1086
        %1226 = vmatmul.f32.gmra.mxu0 %v1148
        %v1227 = vpop.f32.mrf.mxu0
        %v1228 = vadd.f32 0.0, %v1227
        %1229 = vdwg.mxu0
        %1230 = vmatpush.msra.mxu0 0.0
        %1231 = vmatpush.msra.mxu0 0.0
        %1232 = vmatpush.msra.mxu0 0.0
        %1233 = vmatpush.msra.mxu0 0.0
        %1234 = vmatpush.msra.mxu0 0.0
        %1235 = vmatpush.msra.mxu0 0.0
        %1236 = vmatpush.msra.mxu0 0.0
        %1237 = vmatpush.msra.mxu0 0.0
        %1238 = vmatpush.msra.mxu0 0.0
        %1239 = vmatpush.msra.mxu0 0.0
        %1240 = vmatpush.msra.mxu0 0.0
        %1241 = vmatpush.msra.mxu0 0.0
        %1242 = vmatpush.msra.mxu0 %v1135
        %1243 = vmatpush.msra.mxu0 %v1119
        %1244 = vmatpush.msra.mxu0 %v1103
        %1245 = vmatpush.msra.mxu0 %v1087
        %1246 = vmatmul.f32.gmra.mxu0 %v1148
        %v1247 = vpop.f32.mrf.mxu0
        %v1248 = vadd.f32 0.0, %v1247
        %1249 = vdwg.mxu0
        %1250 = vmatpush.msra.mxu0 0.0
        %1251 = vmatpush.msra.mxu0 0.0
        %1252 = vmatpush.msra.mxu0 0.0
        %1253 = vmatpush.msra.mxu0 0.0
        %1254 = vmatpush.msra.mxu0 0.0
        %1255 = vmatpush.msra.mxu0 0.0
        %1256 = vmatpush.msra.mxu0 0.0
        %1257 = vmatpush.msra.mxu0 0.0
        %1258 = vmatpush.msra.mxu0 0.0
        %1259 = vmatpush.msra.mxu0 0.0
        %1260 = vmatpush.msra.mxu0 0.0
        %1261 = vmatpush.msra.mxu0 0.0
        %1262 = vmatpush.msra.mxu0 %v1136
        %1263 = vmatpush.msra.mxu0 %v1120
        %1264 = vmatpush.msra.mxu0 %v1104
        %1265 = vmatpush.msra.mxu0 %v1088
        %1266 = vmatmul.f32.gmra.mxu0 %v1148
        %v1267 = vpop.f32.mrf.mxu0
        %v1268 = vadd.f32 0.0, %v1267
        %1269 = vdwg.mxu0
        %1270 = vmatpush.msra.mxu0 0.0
        %1271 = vmatpush.msra.mxu0 0.0
        %1272 = vmatpush.msra.mxu0 0.0
        %1273 = vmatpush.msra.mxu0 0.0
        %1274 = vmatpush.msra.mxu0 0.0
        %1275 = vmatpush.msra.mxu0 0.0
        %1276 = vmatpush.msra.mxu0 0.0
        %1277 = vmatpush.msra.mxu0 0.0
        %1278 = vmatpush.msra.mxu0 0.0
        %1279 = vmatpush.msra.mxu0 0.0
        %1280 = vmatpush.msra.mxu0 0.0
        %1281 = vmatpush.msra.mxu0 0.0
        %1282 = vmatpush.msra.mxu0 %v1137
        %1283 = vmatpush.msra.mxu0 %v1121
        %1284 = vmatpush.msra.mxu0 %v1105
        %1285 = vmatpush.msra.mxu0 %v1089
        %1286 = vmatmul.f32.gmra.mxu0 %v1148
        %v1287 = vpop.f32.mrf.mxu0
        %v1288 = vadd.f32 0.0, %v1287
        %1289 = vdwg.mxu0
        %1290 = vmatpush.msra.mxu0 0.0
        %1291 = vmatpush.msra.mxu0 0.0
        %1292 = vmatpush.msra.mxu0 0.0
        %1293 = vmatpush.msra.mxu0 0.0
        %1294 = vmatpush.msra.mxu0 0.0
        %1295 = vmatpush.msra.mxu0 0.0
        %1296 = vmatpush.msra.mxu0 0.0
        %1297 = vmatpush.msra.mxu0 0.0
        %1298 = vmatpush.msra.mxu0 0.0
        %1299 = vmatpush.msra.mxu0 0.0
        %1300 = vmatpush.msra.mxu0 0.0
        %1301 = vmatpush.msra.mxu0 0.0
        %1302 = vmatpush.msra.mxu0 %v1138
        %1303 = vmatpush.msra.mxu0 %v1122
        %1304 = vmatpush.msra.mxu0 %v1106
        %1305 = vmatpush.msra.mxu0 %v1090
        %1306 = vmatmul.f32.gmra.mxu0 %v1148
        %v1307 = vpop.f32.mrf.mxu0
        %v1308 = vadd.f32 0.0, %v1307
        %1309 = vdwg.mxu0
        %1310 = vmatpush.msra.mxu0 0.0
        %1311 = vmatpush.msra.mxu0 0.0
        %1312 = vmatpush.msra.mxu0 0.0
        %1313 = vmatpush.msra.mxu0 0.0
        %1314 = vmatpush.msra.mxu0 0.0
        %1315 = vmatpush.msra.mxu0 0.0
        %1316 = vmatpush.msra.mxu0 0.0
        %1317 = vmatpush.msra.mxu0 0.0
        %1318 = vmatpush.msra.mxu0 0.0
        %1319 = vmatpush.msra.mxu0 0.0
        %1320 = vmatpush.msra.mxu0 0.0
        %1321 = vmatpush.msra.mxu0 0.0
        %1322 = vmatpush.msra.mxu0 %v1139
        %1323 = vmatpush.msra.mxu0 %v1123
        %1324 = vmatpush.msra.mxu0 %v1107
        %1325 = vmatpush.msra.mxu0 %v1091
        %1326 = vmatmul.f32.gmra.mxu0 %v1148
        %v1327 = vpop.f32.mrf.mxu0
        %v1328 = vadd.f32 0.0, %v1327
        %1329 = vdwg.mxu0
        %1330 = vmatpush.msra.mxu0 0.0
        %1331 = vmatpush.msra.mxu0 0.0
        %1332 = vmatpush.msra.mxu0 0.0
        %1333 = vmatpush.msra.mxu0 0.0
        %1334 = vmatpush.msra.mxu0 0.0
        %1335 = vmatpush.msra.mxu0 0.0
        %1336 = vmatpush.msra.mxu0 0.0
        %1337 = vmatpush.msra.mxu0 0.0
        %1338 = vmatpush.msra.mxu0 0.0
        %1339 = vmatpush.msra.mxu0 0.0
        %1340 = vmatpush.msra.mxu0 0.0
        %1341 = vmatpush.msra.mxu0 0.0
        %1342 = vmatpush.msra.mxu0 %v1140
        %1343 = vmatpush.msra.mxu0 %v1124
        %1344 = vmatpush.msra.mxu0 %v1108
        %1345 = vmatpush.msra.mxu0 %v1092
        %1346 = vmatmul.f32.gmra.mxu0 %v1148
        %v1347 = vpop.f32.mrf.mxu0
        %v1348 = vadd.f32 0.0, %v1347
        %1349 = vdwg.mxu0
        %1350 = vmatpush.msra.mxu0 0.0
        %1351 = vmatpush.msra.mxu0 0.0
        %1352 = vmatpush.msra.mxu0 0.0
        %1353 = vmatpush.msra.mxu0 0.0
        %1354 = vmatpush.msra.mxu0 0.0
        %1355 = vmatpush.msra.mxu0 0.0
        %1356 = vmatpush.msra.mxu0 0.0
        %1357 = vmatpush.msra.mxu0 0.0
        %1358 = vmatpush.msra.mxu0 0.0
        %1359 = vmatpush.msra.mxu0 0.0
        %1360 = vmatpush.msra.mxu0 0.0
        %1361 = vmatpush.msra.mxu0 0.0
        %1362 = vmatpush.msra.mxu0 %v1141
        %1363 = vmatpush.msra.mxu0 %v1125
        %1364 = vmatpush.msra.mxu0 %v1109
        %1365 = vmatpush.msra.mxu0 %v1093
        %1366 = vmatmul.f32.gmra.mxu0 %v1148
        %v1367 = vpop.f32.mrf.mxu0
        %v1368 = vadd.f32 0.0, %v1367
        %1369 = vdwg.mxu0
        %1370 = vmatpush.msra.mxu0 0.0
        %1371 = vmatpush.msra.mxu0 0.0
        %1372 = vmatpush.msra.mxu0 0.0
        %1373 = vmatpush.msra.mxu0 0.0
        %1374 = vmatpush.msra.mxu0 0.0
        %1375 = vmatpush.msra.mxu0 0.0
        %1376 = vmatpush.msra.mxu0 0.0
        %1377 = vmatpush.msra.mxu0 0.0
        %1378 = vmatpush.msra.mxu0 0.0
        %1379 = vmatpush.msra.mxu0 0.0
        %1380 = vmatpush.msra.mxu0 0.0
        %1381 = vmatpush.msra.mxu0 0.0
        %1382 = vmatpush.msra.mxu0 %v1142
        %1383 = vmatpush.msra.mxu0 %v1126
        %1384 = vmatpush.msra.mxu0 %v1110
        %1385 = vmatpush.msra.mxu0 %v1094
        %1386 = vmatmul.f32.gmra.mxu0 %v1148
        %v1387 = vpop.f32.mrf.mxu0
        %v1388 = vadd.f32 0.0, %v1387
        %1389 = vdwg.mxu0
        %1390 = vmatpush.msra.mxu0 0.0
        %1391 = vmatpush.msra.mxu0 0.0
        %1392 = vmatpush.msra.mxu0 0.0
        %1393 = vmatpush.msra.mxu0 0.0
        %1394 = vmatpush.msra.mxu0 0.0
        %1395 = vmatpush.msra.mxu0 0.0
        %1396 = vmatpush.msra.mxu0 0.0
        %1397 = vmatpush.msra.mxu0 0.0
        %1398 = vmatpush.msra.mxu0 0.0
        %1399 = vmatpush.msra.mxu0 0.0
        %1400 = vmatpush.msra.mxu0 0.0
        %1401 = vmatpush.msra.mxu0 0.0
        %1402 = vmatpush.msra.mxu0 %v1143
        %1403 = vmatpush.msra.mxu0 %v1127
        %1404 = vmatpush.msra.mxu0 %v1111
        %1405 = vmatpush.msra.mxu0 %v1095
        %1406 = vmatmul.f32.gmra.mxu0 %v1148
        %v1407 = vpop.f32.mrf.mxu0
        %v1408 = vadd.f32 0.0, %v1407
        %1409 = vdwg.mxu0
        %1410 = vmatpush.msra.mxu0 0.0
        %1411 = vmatpush.msra.mxu0 0.0
        %1412 = vmatpush.msra.mxu0 0.0
        %1413 = vmatpush.msra.mxu0 0.0
        %1414 = vmatpush.msra.mxu0 0.0
        %1415 = vmatpush.msra.mxu0 0.0
        %1416 = vmatpush.msra.mxu0 0.0
        %1417 = vmatpush.msra.mxu0 0.0
        %1418 = vmatpush.msra.mxu0 0.0
        %1419 = vmatpush.msra.mxu0 0.0
        %1420 = vmatpush.msra.mxu0 0.0
        %1421 = vmatpush.msra.mxu0 0.0
        %1422 = vmatpush.msra.mxu0 %v1144
        %1423 = vmatpush.msra.mxu0 %v1128
        %1424 = vmatpush.msra.mxu0 %v1112
        %1425 = vmatpush.msra.mxu0 %v1096
        %1426 = vmatmul.f32.gmra.mxu0 %v1148
        %v1427 = vpop.f32.mrf.mxu0
        %v1428 = vadd.f32 0.0, %v1427
        %1429 = vdwg.mxu0
        %1430 = vmatpush.msra.mxu0 0.0
        %1431 = vmatpush.msra.mxu0 0.0
        %1432 = vmatpush.msra.mxu0 0.0
        %1433 = vmatpush.msra.mxu0 0.0
        %1434 = vmatpush.msra.mxu0 0.0
        %1435 = vmatpush.msra.mxu0 0.0
        %1436 = vmatpush.msra.mxu0 0.0
        %1437 = vmatpush.msra.mxu0 0.0
        %1438 = vmatpush.msra.mxu0 0.0
        %1439 = vmatpush.msra.mxu0 0.0
        %1440 = vmatpush.msra.mxu0 0.0
        %1441 = vmatpush.msra.mxu0 0.0
        %1442 = vmatpush.msra.mxu0 %v1145
        %1443 = vmatpush.msra.mxu0 %v1129
        %1444 = vmatpush.msra.mxu0 %v1113
        %1445 = vmatpush.msra.mxu0 %v1097
        %1446 = vmatmul.f32.gmra.mxu0 %v1148
        %v1447 = vpop.f32.mrf.mxu0
        %v1448 = vadd.f32 0.0, %v1447
        %1449 = vdwg.mxu0
        %1450 = vmatpush.msra.mxu0 0.0
        %1451 = vmatpush.msra.mxu0 0.0
        %1452 = vmatpush.msra.mxu0 0.0
        %1453 = vmatpush.msra.mxu0 0.0
        %1454 = vmatpush.msra.mxu0 0.0
        %1455 = vmatpush.msra.mxu0 0.0
        %1456 = vmatpush.msra.mxu0 0.0
        %1457 = vmatpush.msra.mxu0 0.0
        %1458 = vmatpush.msra.mxu0 0.0
        %1459 = vmatpush.msra.mxu0 0.0
        %1460 = vmatpush.msra.mxu0 0.0
        %1461 = vmatpush.msra.mxu0 0.0
        %1462 = vmatpush.msra.mxu0 %v1146
        %1463 = vmatpush.msra.mxu0 %v1130
        %1464 = vmatpush.msra.mxu0 %v1114
        %1465 = vmatpush.msra.mxu0 %v1098
        %1466 = vmatmul.f32.gmra.mxu0 %v1148
        %v1467 = vpop.f32.mrf.mxu0
        %v1468 = vadd.f32 0.0, %v1467
        %1469 = vdwg.mxu0
        %v1470 = vadd.f32 %v781, %v1168
        %v1471 = vadd.f32 %v801, %v1188
        %v1472 = vadd.f32 %v821, %v1208
        %v1473 = vadd.f32 %v841, %v1228
        %v1474 = vadd.f32 %v861, %v1248
        %v1475 = vadd.f32 %v881, %v1268
        %v1476 = vadd.f32 %v901, %v1288
        %v1477 = vadd.f32 %v921, %v1308
        %v1478 = vadd.f32 %v941, %v1328
        %v1479 = vadd.f32 %v961, %v1348
        %v1480 = vadd.f32 %v981, %v1368
        %v1481 = vadd.f32 %v1001, %v1388
        %v1482 = vadd.f32 %v1021, %v1408
        %v1483 = vadd.f32 %v1041, %v1428
        %v1484 = vadd.f32 %v1061, %v1448
        %v1485 = vadd.f32 %v1081, %v1468
        %v1486 = vld [vmem:[%s2] sm:$0xff]
        %v1487 = vld [vmem:[%s2 + $0x8] sm:$0xff]
        %v1490 = vperm.slane %v1486, 0
        %v1491 = vperm.slane %v1486, 1
        %v1492 = vperm.slane %v1486, 2
        %v1493 = vperm.slane %v1486, 3
        %v1494 = vperm.slane %v1486, 4
        %v1495 = vperm.slane %v1486, 5
        %v1496 = vperm.slane %v1486, 6
        %v1497 = vperm.slane %v1486, 7
        %v1498 = vperm.slane %v1487, 0
        %v1499 = vperm.slane %v1487, 1
        %v1500 = vperm.slane %v1487, 2
        %v1501 = vperm.slane %v1487, 3
        %v1502 = vperm.slane %v1487, 4
        %v1503 = vperm.slane %v1487, 5
        %v1504 = vperm.slane %v1487, 6
        %v1505 = vperm.slane %v1487, 7
        %v1522 = vadd.f32 %v1470, %v1490
        %v1523 = vadd.f32 %v1471, %v1491
        %v1524 = vadd.f32 %v1472, %v1492
        %v1525 = vadd.f32 %v1473, %v1493
        %v1526 = vadd.f32 %v1474, %v1494
        %v1527 = vadd.f32 %v1475, %v1495
        %v1528 = vadd.f32 %v1476, %v1496
        %v1529 = vadd.f32 %v1477, %v1497
        %v1530 = vadd.f32 %v1478, %v1498
        %v1531 = vadd.f32 %v1479, %v1499
        %v1532 = vadd.f32 %v1480, %v1500
        %v1533 = vadd.f32 %v1481, %v1501
        %v1534 = vadd.f32 %v1482, %v1502
        %v1535 = vadd.f32 %v1483, %v1503
        %v1536 = vadd.f32 %v1484, %v1504
        %v1537 = vadd.f32 %v1485, %v1505
        %v1538 = vmax.f32 %v1522, 0.0
        %v1539 = vmax.f32 %v1523, 0.0
        %v1540 = vmax.f32 %v1524, 0.0
        %v1541 = vmax.f32 %v1525, 0.0
        %v1542 = vmax.f32 %v1526, 0.0
        %v1543 = vmax.f32 %v1527, 0.0
        %v1544 = vmax.f32 %v1528, 0.0
        %v1545 = vmax.f32 %v1529, 0.0
        %v1546 = vmax.f32 %v1530, 0.0
        %v1547 = vmax.f32 %v1531, 0.0
        %v1548 = vmax.f32 %v1532, 0.0
        %v1549 = vmax.f32 %v1533, 0.0
        %v1550 = vmax.f32 %v1534, 0.0
        %v1551 = vmax.f32 %v1535, 0.0
        %v1552 = vmax.f32 %v1536, 0.0
        %v1553 = vmax.f32 %v1537, 0.0
        %1554 = vst [vmem:[%s282] sm:$0xff] %v1538
        %1555 = vst [vmem:[%s282 + $0x8] sm:$0xff] %v1539
        %1556 = vst [vmem:[%s282 + $0x10] sm:$0xff] %v1540
        %1557 = vst [vmem:[%s282 + $0x18] sm:$0xff] %v1541
        %1558 = vst [vmem:[%s282 + $0x20] sm:$0xff] %v1542
        %1559 = vst [vmem:[%s282 + $0x28] sm:$0xff] %v1543
        %1560 = vst [vmem:[%s282 + $0x30] sm:$0xff] %v1544
        %1561 = vst [vmem:[%s282 + $0x38] sm:$0xff] %v1545
        %1562 = vst [vmem:[%s282 + $0x40] sm:$0xff] %v1546
        %1563 = vst [vmem:[%s282 + $0x48] sm:$0xff] %v1547
        %1564 = vst [vmem:[%s282 + $0x50] sm:$0xff] %v1548
        %1565 = vst [vmem:[%s282 + $0x58] sm:$0xff] %v1549
        %1566 = vst [vmem:[%s282 + $0x60] sm:$0xff] %v1550
        %1567 = vst [vmem:[%s282 + $0x68] sm:$0xff] %v1551
        %1568 = vst [vmem:[%s282 + $0x70] sm:$0xff] %v1552
        %1569 = vst [vmem:[%s282 + $0x78] sm:$0xff] %v1553
        %v1570 = vld [vmem:[#allocation5] sm:$0xff]
        %v1571 = vld [vmem:[#allocation5 + $0x8] sm:$0xff]
        %v1572 = vld [vmem:[#allocation5 + $0x10] sm:$0xff]
        %v1573 = vld [vmem:[#allocation5 + $0x18] sm:$0xff]
        %v1574 = vld [vmem:[#allocation5 + $0x20] sm:$0xff]
        %v1575 = vld [vmem:[#allocation5 + $0x28] sm:$0xff]
        %v1576 = vld [vmem:[#allocation5 + $0x30] sm:$0xff]
        %v1577 = vld [vmem:[#allocation5 + $0x38] sm:$0xff]
        %v1578 = vld [vmem:[#allocation5 + $0x40] sm:$0xff]
        %v1579 = vld [vmem:[#allocation5 + $0x48] sm:$0xff]
        %v1580 = vld [vmem:[#allocation5 + $0x50] sm:$0xff]
        %v1581 = vld [vmem:[#allocation5 + $0x58] sm:$0xff]
        %v1582 = vld [vmem:[#allocation5 + $0x60] sm:$0xff]
        %v1583 = vld [vmem:[#allocation5 + $0x68] sm:$0xff]
        %v1584 = vld [vmem:[#allocation5 + $0x70] sm:$0xff]
        %v1585 = vld [vmem:[#allocation5 + $0x78] sm:$0xff]
        %v1586 = vld [vmem:[#allocation5 + $0x80] sm:$0xff]
        %v1587 = vld [vmem:[#allocation5 + $0x88] sm:$0xff]
        %v1588 = vld [vmem:[#allocation5 + $0x90] sm:$0xff]
        %v1589 = vld [vmem:[#allocation5 + $0x98] sm:$0xff]
        %v1590 = vld [vmem:[#allocation5 + $0xa0] sm:$0xff]
        %v1591 = vld [vmem:[#allocation5 + $0xa8] sm:$0xff]
        %v1592 = vld [vmem:[#allocation5 + $0xb0] sm:$0xff]
        %v1593 = vld [vmem:[#allocation5 + $0xb8] sm:$0xff]
        %v1594 = vld [vmem:[#allocation5 + $0xc0] sm:$0xff]
        %v1595 = vld [vmem:[#allocation5 + $0xc8] sm:$0xff]
        %v1596 = vld [vmem:[#allocation5 + $0xd0] sm:$0xff]
        %v1597 = vld [vmem:[#allocation5 + $0xd8] sm:$0xff]
        %v1598 = vld [vmem:[#allocation5 + $0xe0] sm:$0xff]
        %v1599 = vld [vmem:[#allocation5 + $0xe8] sm:$0xff]
        %v1600 = vld [vmem:[#allocation5 + $0xf0] sm:$0xff]
        %v1601 = vld [vmem:[#allocation5 + $0xf8] sm:$0xff]
        %v1602 = vld [vmem:[#allocation5 + $0x100] sm:$0xff]
        %v1603 = vld [vmem:[#allocation5 + $0x108] sm:$0xff]
        %v1604 = vld [vmem:[#allocation5 + $0x110] sm:$0xff]
        %v1605 = vld [vmem:[#allocation5 + $0x118] sm:$0xff]
        %v1606 = vld [vmem:[#allocation5 + $0x120] sm:$0xff]
        %v1607 = vld [vmem:[#allocation5 + $0x128] sm:$0xff]
        %v1608 = vld [vmem:[#allocation5 + $0x130] sm:$0xff]
        %v1609 = vld [vmem:[#allocation5 + $0x138] sm:$0xff]
        %v1610 = vld [vmem:[#allocation5 + $0x140] sm:$0xff]
        %v1611 = vld [vmem:[#allocation5 + $0x148] sm:$0xff]
        %v1612 = vld [vmem:[#allocation5 + $0x150] sm:$0xff]
        %v1613 = vld [vmem:[#allocation5 + $0x158] sm:$0xff]
        %v1614 = vld [vmem:[#allocation5 + $0x160] sm:$0xff]
        %v1615 = vld [vmem:[#allocation5 + $0x168] sm:$0xff]
        %v1616 = vld [vmem:[#allocation5 + $0x170] sm:$0xff]
        %v1617 = vld [vmem:[#allocation5 + $0x178] sm:$0xff]
        %v1618 = vld [vmem:[#allocation5 + $0x180] sm:$0xff]
        %v1619 = vld [vmem:[#allocation5 + $0x188] sm:$0xff]
        %v1620 = vld [vmem:[#allocation5 + $0x190] sm:$0xff]
        %v1621 = vld [vmem:[#allocation5 + $0x198] sm:$0xff]
        %v1622 = vld [vmem:[#allocation5 + $0x1a0] sm:$0xff]
        %v1623 = vld [vmem:[#allocation5 + $0x1a8] sm:$0xff]
        %v1624 = vld [vmem:[#allocation5 + $0x1b0] sm:$0xff]
        %v1625 = vld [vmem:[#allocation5 + $0x1b8] sm:$0xff]
        %v1626 = vld [vmem:[#allocation5 + $0x1c0] sm:$0xff]
        %v1627 = vld [vmem:[#allocation5 + $0x1c8] sm:$0xff]
        %v1628 = vld [vmem:[#allocation5 + $0x1d0] sm:$0xff]
        %v1629 = vld [vmem:[#allocation5 + $0x1d8] sm:$0xff]
        %v1630 = vld [vmem:[#allocation5 + $0x1e0] sm:$0xff]
        %v1631 = vld [vmem:[#allocation5 + $0x1e8] sm:$0xff]
        %v1632 = vld [vmem:[#allocation5 + $0x1f0] sm:$0xff]
        %v1633 = vld [vmem:[#allocation5 + $0x1f8] sm:$0xff]
        %v1634 = vld [vmem:[#allocation5 + $0x200] sm:$0xff]
        %v1635 = vld [vmem:[#allocation5 + $0x208] sm:$0xff]
        %v1636 = vld [vmem:[#allocation5 + $0x210] sm:$0xff]
        %v1637 = vld [vmem:[#allocation5 + $0x218] sm:$0xff]
        %v1638 = vld [vmem:[#allocation5 + $0x220] sm:$0xff]
        %v1639 = vld [vmem:[#allocation5 + $0x228] sm:$0xff]
        %v1640 = vld [vmem:[#allocation5 + $0x230] sm:$0xff]
        %v1641 = vld [vmem:[#allocation5 + $0x238] sm:$0xff]
        %v1642 = vld [vmem:[#allocation5 + $0x240] sm:$0xff]
        %v1643 = vld [vmem:[#allocation5 + $0x248] sm:$0xff]
        %v1644 = vld [vmem:[#allocation5 + $0x250] sm:$0xff]
        %v1645 = vld [vmem:[#allocation5 + $0x258] sm:$0xff]
        %v1646 = vld [vmem:[#allocation5 + $0x260] sm:$0xff]
        %v1647 = vld [vmem:[#allocation5 + $0x268] sm:$0xff]
        %v1648 = vld [vmem:[#allocation5 + $0x270] sm:$0xff]
        %v1649 = vld [vmem:[#allocation5 + $0x278] sm:$0xff]
        %v1650 = vld [vmem:[#allocation5 + $0x280] sm:$0xff]
        %v1651 = vld [vmem:[#allocation5 + $0x288] sm:$0xff]
        %v1652 = vld [vmem:[#allocation5 + $0x290] sm:$0xff]
        %v1653 = vld [vmem:[#allocation5 + $0x298] sm:$0xff]
        %v1654 = vld [vmem:[#allocation5 + $0x2a0] sm:$0xff]
        %v1655 = vld [vmem:[#allocation5 + $0x2a8] sm:$0xff]
        %v1656 = vld [vmem:[#allocation5 + $0x2b0] sm:$0xff]
        %v1657 = vld [vmem:[#allocation5 + $0x2b8] sm:$0xff]
        %v1658 = vld [vmem:[#allocation5 + $0x2c0] sm:$0xff]
        %v1659 = vld [vmem:[#allocation5 + $0x2c8] sm:$0xff]
        %v1660 = vld [vmem:[#allocation5 + $0x2d0] sm:$0xff]
        %v1661 = vld [vmem:[#allocation5 + $0x2d8] sm:$0xff]
        %v1662 = vld [vmem:[#allocation5 + $0x2e0] sm:$0xff]
        %v1663 = vld [vmem:[#allocation5 + $0x2e8] sm:$0xff]
        %v1664 = vld [vmem:[#allocation5 + $0x2f0] sm:$0xff]
        %v1665 = vld [vmem:[#allocation5 + $0x2f8] sm:$0xff]
        %v1666 = vld [vmem:[#allocation5 + $0x300] sm:$0xff]
        %v1667 = vld [vmem:[#allocation5 + $0x308] sm:$0xff]
        %v1668 = vld [vmem:[#allocation5 + $0x310] sm:$0xff]
        %v1669 = vld [vmem:[#allocation5 + $0x318] sm:$0xff]
        %v1670 = vld [vmem:[#allocation5 + $0x320] sm:$0xff]
        %v1671 = vld [vmem:[#allocation5 + $0x328] sm:$0xff]
        %v1672 = vld [vmem:[#allocation5 + $0x330] sm:$0xff]
        %v1673 = vld [vmem:[#allocation5 + $0x338] sm:$0xff]
        %v1674 = vld [vmem:[#allocation5 + $0x340] sm:$0xff]
        %v1675 = vld [vmem:[#allocation5 + $0x348] sm:$0xff]
        %v1676 = vld [vmem:[#allocation5 + $0x350] sm:$0xff]
        %v1677 = vld [vmem:[#allocation5 + $0x358] sm:$0xff]
        %v1678 = vld [vmem:[#allocation5 + $0x360] sm:$0xff]
        %v1679 = vld [vmem:[#allocation5 + $0x368] sm:$0xff]
        %v1680 = vld [vmem:[#allocation5 + $0x370] sm:$0xff]
        %v1681 = vld [vmem:[#allocation5 + $0x378] sm:$0xff]
        %v1682 = vld [vmem:[#allocation5 + $0x380] sm:$0xff]
        %v1683 = vld [vmem:[#allocation5 + $0x388] sm:$0xff]
        %v1684 = vld [vmem:[#allocation5 + $0x390] sm:$0xff]
        %v1685 = vld [vmem:[#allocation5 + $0x398] sm:$0xff]
        %v1686 = vld [vmem:[#allocation5 + $0x3a0] sm:$0xff]
        %v1687 = vld [vmem:[#allocation5 + $0x3a8] sm:$0xff]
        %v1688 = vld [vmem:[#allocation5 + $0x3b0] sm:$0xff]
        %v1689 = vld [vmem:[#allocation5 + $0x3b8] sm:$0xff]
        %v1690 = vld [vmem:[#allocation5 + $0x3c0] sm:$0xff]
        %v1691 = vld [vmem:[#allocation5 + $0x3c8] sm:$0xff]
        %v1692 = vld [vmem:[#allocation5 + $0x3d0] sm:$0xff]
        %v1693 = vld [vmem:[#allocation5 + $0x3d8] sm:$0xff]
        %v1694 = vld [vmem:[#allocation5 + $0x3e0] sm:$0xff]
        %v1695 = vld [vmem:[#allocation5 + $0x3e8] sm:$0xff]
        %v1696 = vld [vmem:[#allocation5 + $0x3f0] sm:$0xff]
        %v1697 = vld [vmem:[#allocation5 + $0x3f8] sm:$0xff]
        %v1698 = vld [vmem:[#allocation5 + $0x400] sm:$0xff]
        %v1699 = vld [vmem:[#allocation5 + $0x408] sm:$0xff]
        %v1700 = vld [vmem:[#allocation5 + $0x410] sm:$0xff]
        %v1701 = vld [vmem:[#allocation5 + $0x418] sm:$0xff]
        %v1702 = vld [vmem:[#allocation5 + $0x420] sm:$0xff]
        %v1703 = vld [vmem:[#allocation5 + $0x428] sm:$0xff]
        %v1704 = vld [vmem:[#allocation5 + $0x430] sm:$0xff]
        %v1705 = vld [vmem:[#allocation5 + $0x438] sm:$0xff]
        %v1706 = vld [vmem:[#allocation5 + $0x440] sm:$0xff]
        %v1707 = vld [vmem:[#allocation5 + $0x448] sm:$0xff]
        %v1708 = vld [vmem:[#allocation5 + $0x450] sm:$0xff]
        %v1709 = vld [vmem:[#allocation5 + $0x458] sm:$0xff]
        %v1710 = vld [vmem:[#allocation5 + $0x460] sm:$0xff]
        %v1711 = vld [vmem:[#allocation5 + $0x468] sm:$0xff]
        %v1712 = vld [vmem:[#allocation5 + $0x470] sm:$0xff]
        %v1713 = vld [vmem:[#allocation5 + $0x478] sm:$0xff]
        %v1714 = vld [vmem:[#allocation5 + $0x480] sm:$0xff]
        %v1715 = vld [vmem:[#allocation5 + $0x488] sm:$0xff]
        %v1716 = vld [vmem:[#allocation5 + $0x490] sm:$0xff]
        %v1717 = vld [vmem:[#allocation5 + $0x498] sm:$0xff]
        %v1718 = vld [vmem:[#allocation5 + $0x4a0] sm:$0xff]
        %v1719 = vld [vmem:[#allocation5 + $0x4a8] sm:$0xff]
        %v1720 = vld [vmem:[#allocation5 + $0x4b0] sm:$0xff]
        %v1721 = vld [vmem:[#allocation5 + $0x4b8] sm:$0xff]
        %v1722 = vld [vmem:[#allocation5 + $0x4c0] sm:$0xff]
        %v1723 = vld [vmem:[#allocation5 + $0x4c8] sm:$0xff]
        %v1724 = vld [vmem:[#allocation5 + $0x4d0] sm:$0xff]
        %v1725 = vld [vmem:[#allocation5 + $0x4d8] sm:$0xff]
        %v1726 = vld [vmem:[#allocation5 + $0x4e0] sm:$0xff]
        %v1727 = vld [vmem:[#allocation5 + $0x4e8] sm:$0xff]
        %v1728 = vld [vmem:[#allocation5 + $0x4f0] sm:$0xff]
        %v1729 = vld [vmem:[#allocation5 + $0x4f8] sm:$0xff]
        %v1730 = vld [vmem:[#allocation5 + $0x500] sm:$0xff]
        %v1731 = vld [vmem:[#allocation5 + $0x508] sm:$0xff]
        %v1732 = vld [vmem:[#allocation5 + $0x510] sm:$0xff]
        %v1733 = vld [vmem:[#allocation5 + $0x518] sm:$0xff]
        %v1734 = vld [vmem:[#allocation5 + $0x520] sm:$0xff]
        %v1735 = vld [vmem:[#allocation5 + $0x528] sm:$0xff]
        %v1736 = vld [vmem:[#allocation5 + $0x530] sm:$0xff]
        %v1737 = vld [vmem:[#allocation5 + $0x538] sm:$0xff]
        %v1738 = vld [vmem:[#allocation5 + $0x540] sm:$0xff]
        %v1739 = vld [vmem:[#allocation5 + $0x548] sm:$0xff]
        %v1740 = vld [vmem:[#allocation5 + $0x550] sm:$0xff]
        %v1741 = vld [vmem:[#allocation5 + $0x558] sm:$0xff]
        %v1742 = vld [vmem:[#allocation5 + $0x560] sm:$0xff]
        %v1743 = vld [vmem:[#allocation5 + $0x568] sm:$0xff]
        %v1744 = vld [vmem:[#allocation5 + $0x570] sm:$0xff]
        %v1745 = vld [vmem:[#allocation5 + $0x578] sm:$0xff]
        %v1746 = vld [vmem:[#allocation5 + $0x580] sm:$0xff]
        %v1747 = vld [vmem:[#allocation5 + $0x588] sm:$0xff]
        %v1748 = vld [vmem:[#allocation5 + $0x590] sm:$0xff]
        %v1749 = vld [vmem:[#allocation5 + $0x598] sm:$0xff]
        %v1750 = vld [vmem:[#allocation5 + $0x5a0] sm:$0xff]
        %v1751 = vld [vmem:[#allocation5 + $0x5a8] sm:$0xff]
        %v1752 = vld [vmem:[#allocation5 + $0x5b0] sm:$0xff]
        %v1753 = vld [vmem:[#allocation5 + $0x5b8] sm:$0xff]
        %v1754 = vld [vmem:[#allocation5 + $0x5c0] sm:$0xff]
        %v1755 = vld [vmem:[#allocation5 + $0x5c8] sm:$0xff]
        %v1756 = vld [vmem:[#allocation5 + $0x5d0] sm:$0xff]
        %v1757 = vld [vmem:[#allocation5 + $0x5d8] sm:$0xff]
        %v1758 = vld [vmem:[#allocation5 + $0x5e0] sm:$0xff]
        %v1759 = vld [vmem:[#allocation5 + $0x5e8] sm:$0xff]
        %v1760 = vld [vmem:[#allocation5 + $0x5f0] sm:$0xff]
        %v1761 = vld [vmem:[#allocation5 + $0x5f8] sm:$0xff]
        %v1762 = vld [vmem:[#allocation5 + $0x600] sm:$0xff]
        %v1763 = vld [vmem:[#allocation5 + $0x608] sm:$0xff]
        %v1764 = vld [vmem:[#allocation5 + $0x610] sm:$0xff]
        %v1765 = vld [vmem:[#allocation5 + $0x618] sm:$0xff]
        %v1766 = vld [vmem:[#allocation5 + $0x620] sm:$0xff]
        %v1767 = vld [vmem:[#allocation5 + $0x628] sm:$0xff]
        %v1768 = vld [vmem:[#allocation5 + $0x630] sm:$0xff]
        %v1769 = vld [vmem:[#allocation5 + $0x638] sm:$0xff]
        %v1770 = vld [vmem:[#allocation5 + $0x640] sm:$0xff]
        %v1771 = vld [vmem:[#allocation5 + $0x648] sm:$0xff]
        %v1772 = vld [vmem:[#allocation5 + $0x650] sm:$0xff]
        %v1773 = vld [vmem:[#allocation5 + $0x658] sm:$0xff]
        %v1774 = vld [vmem:[#allocation5 + $0x660] sm:$0xff]
        %v1775 = vld [vmem:[#allocation5 + $0x668] sm:$0xff]
        %v1776 = vld [vmem:[#allocation5 + $0x670] sm:$0xff]
        %v1777 = vld [vmem:[#allocation5 + $0x678] sm:$0xff]
        %v1778 = vld [vmem:[#allocation5 + $0x680] sm:$0xff]
        %v1779 = vld [vmem:[#allocation5 + $0x688] sm:$0xff]
        %v1780 = vld [vmem:[#allocation5 + $0x690] sm:$0xff]
        %v1781 = vld [vmem:[#allocation5 + $0x698] sm:$0xff]
        %v1782 = vld [vmem:[#allocation5 + $0x6a0] sm:$0xff]
        %v1783 = vld [vmem:[#allocation5 + $0x6a8] sm:$0xff]
        %v1784 = vld [vmem:[#allocation5 + $0x6b0] sm:$0xff]
        %v1785 = vld [vmem:[#allocation5 + $0x6b8] sm:$0xff]
        %v1786 = vld [vmem:[#allocation5 + $0x6c0] sm:$0xff]
        %v1787 = vld [vmem:[#allocation5 + $0x6c8] sm:$0xff]
        %v1788 = vld [vmem:[#allocation5 + $0x6d0] sm:$0xff]
        %v1789 = vld [vmem:[#allocation5 + $0x6d8] sm:$0xff]
        %v1790 = vld [vmem:[#allocation5 + $0x6e0] sm:$0xff]
        %v1791 = vld [vmem:[#allocation5 + $0x6e8] sm:$0xff]
        %v1792 = vld [vmem:[#allocation5 + $0x6f0] sm:$0xff]
        %v1793 = vld [vmem:[#allocation5 + $0x6f8] sm:$0xff]
        %v1794 = vld [vmem:[#allocation5 + $0x700] sm:$0xff]
        %v1795 = vld [vmem:[#allocation5 + $0x708] sm:$0xff]
        %v1796 = vld [vmem:[#allocation5 + $0x710] sm:$0xff]
        %v1797 = vld [vmem:[#allocation5 + $0x718] sm:$0xff]
        %v1798 = vld [vmem:[#allocation5 + $0x720] sm:$0xff]
        %v1799 = vld [vmem:[#allocation5 + $0x728] sm:$0xff]
        %v1800 = vld [vmem:[#allocation5 + $0x730] sm:$0xff]
        %v1801 = vld [vmem:[#allocation5 + $0x738] sm:$0xff]
        %v1802 = vld [vmem:[#allocation5 + $0x740] sm:$0xff]
        %v1803 = vld [vmem:[#allocation5 + $0x748] sm:$0xff]
        %v1804 = vld [vmem:[#allocation5 + $0x750] sm:$0xff]
        %v1805 = vld [vmem:[#allocation5 + $0x758] sm:$0xff]
        %v1806 = vld [vmem:[#allocation5 + $0x760] sm:$0xff]
        %v1807 = vld [vmem:[#allocation5 + $0x768] sm:$0xff]
        %v1808 = vld [vmem:[#allocation5 + $0x770] sm:$0xff]
        %v1809 = vld [vmem:[#allocation5 + $0x778] sm:$0xff]
        %v1810 = vld [vmem:[#allocation5 + $0x780] sm:$0xff]
        %v1811 = vld [vmem:[#allocation5 + $0x788] sm:$0xff]
        %v1812 = vld [vmem:[#allocation5 + $0x790] sm:$0xff]
        %v1813 = vld [vmem:[#allocation5 + $0x798] sm:$0xff]
        %v1814 = vld [vmem:[#allocation5 + $0x7a0] sm:$0xff]
        %v1815 = vld [vmem:[#allocation5 + $0x7a8] sm:$0xff]
        %v1816 = vld [vmem:[#allocation5 + $0x7b0] sm:$0xff]
        %v1817 = vld [vmem:[#allocation5 + $0x7b8] sm:$0xff]
        %v1818 = vld [vmem:[#allocation5 + $0x7c0] sm:$0xff]
        %v1819 = vld [vmem:[#allocation5 + $0x7c8] sm:$0xff]
        %v1820 = vld [vmem:[#allocation5 + $0x7d0] sm:$0xff]
        %v1821 = vld [vmem:[#allocation5 + $0x7d8] sm:$0xff]
        %v1822 = vld [vmem:[#allocation5 + $0x7e0] sm:$0xff]
        %v1823 = vld [vmem:[#allocation5 + $0x7e8] sm:$0xff]
        %v1824 = vld [vmem:[#allocation5 + $0x7f0] sm:$0xff]
        %v1825 = vld [vmem:[#allocation5 + $0x7f8] sm:$0xff]
        %1826 = vmatpush.msra.mxu0 %v1585
        %1827 = vmatpush.msra.mxu0 %v1584
        %1828 = vmatpush.msra.mxu0 %v1583
        %1829 = vmatpush.msra.mxu0 %v1582
        %1830 = vmatpush.msra.mxu0 %v1581
        %1831 = vmatpush.msra.mxu0 %v1580
        %1832 = vmatpush.msra.mxu0 %v1579
        %1833 = vmatpush.msra.mxu0 %v1578
        %1834 = vmatpush.msra.mxu0 %v1577
        %1835 = vmatpush.msra.mxu0 %v1576
        %1836 = vmatpush.msra.mxu0 %v1575
        %1837 = vmatpush.msra.mxu0 %v1574
        %1838 = vmatpush.msra.mxu0 %v1573
        %1839 = vmatpush.msra.mxu0 %v1572
        %1840 = vmatpush.msra.mxu0 %v1571
        %1841 = vmatpush.msra.mxu0 %v1570
        %1842 = vmatmul.f32.gmra.mxu0 %v1538
        %v1843 = vpop.f32.mrf.mxu0
        %v1844 = vadd.f32 0.0, %v1843
        %1845 = vdwg.mxu0
        %1846 = vmatpush.msra.mxu0 %v1601
        %1847 = vmatpush.msra.mxu0 %v1600
        %1848 = vmatpush.msra.mxu0 %v1599
        %1849 = vmatpush.msra.mxu0 %v1598
        %1850 = vmatpush.msra.mxu0 %v1597
        %1851 = vmatpush.msra.mxu0 %v1596
        %1852 = vmatpush.msra.mxu0 %v1595
        %1853 = vmatpush.msra.mxu0 %v1594
        %1854 = vmatpush.msra.mxu0 %v1593
        %1855 = vmatpush.msra.mxu0 %v1592
        %1856 = vmatpush.msra.mxu0 %v1591
        %1857 = vmatpush.msra.mxu0 %v1590
        %1858 = vmatpush.msra.mxu0 %v1589
        %1859 = vmatpush.msra.mxu0 %v1588
        %1860 = vmatpush.msra.mxu0 %v1587
        %1861 = vmatpush.msra.mxu0 %v1586
        %1862 = vmatmul.f32.gmra.mxu0 %v1539
        %v1863 = vpop.f32.mrf.mxu0
        %v1864 = vadd.f32 %v1844, %v1863
        %1865 = vdwg.mxu0
        %1866 = vmatpush.msra.mxu0 %v1617
        %1867 = vmatpush.msra.mxu0 %v1616
        %1868 = vmatpush.msra.mxu0 %v1615
        %1869 = vmatpush.msra.mxu0 %v1614
        %1870 = vmatpush.msra.mxu0 %v1613
        %1871 = vmatpush.msra.mxu0 %v1612
        %1872 = vmatpush.msra.mxu0 %v1611
        %1873 = vmatpush.msra.mxu0 %v1610
        %1874 = vmatpush.msra.mxu0 %v1609
        %1875 = vmatpush.msra.mxu0 %v1608
        %1876 = vmatpush.msra.mxu0 %v1607
        %1877 = vmatpush.msra.mxu0 %v1606
        %1878 = vmatpush.msra.mxu0 %v1605
        %1879 = vmatpush.msra.mxu0 %v1604
        %1880 = vmatpush.msra.mxu0 %v1603
        %1881 = vmatpush.msra.mxu0 %v1602
        %1882 = vmatmul.f32.gmra.mxu0 %v1540
        %v1883 = vpop.f32.mrf.mxu0
        %v1884 = vadd.f32 %v1864, %v1883
        %1885 = vdwg.mxu0
        %1886 = vmatpush.msra.mxu0 %v1633
        %1887 = vmatpush.msra.mxu0 %v1632
        %1888 = vmatpush.msra.mxu0 %v1631
        %1889 = vmatpush.msra.mxu0 %v1630
        %1890 = vmatpush.msra.mxu0 %v1629
        %1891 = vmatpush.msra.mxu0 %v1628
        %1892 = vmatpush.msra.mxu0 %v1627
        %1893 = vmatpush.msra.mxu0 %v1626
        %1894 = vmatpush.msra.mxu0 %v1625
        %1895 = vmatpush.msra.mxu0 %v1624
        %1896 = vmatpush.msra.mxu0 %v1623
        %1897 = vmatpush.msra.mxu0 %v1622
        %1898 = vmatpush.msra.mxu0 %v1621
        %1899 = vmatpush.msra.mxu0 %v1620
        %1900 = vmatpush.msra.mxu0 %v1619
        %1901 = vmatpush.msra.mxu0 %v1618
        %1902 = vmatmul.f32.gmra.mxu0 %v1541
        %v1903 = vpop.f32.mrf.mxu0
        %v1904 = vadd.f32 %v1884, %v1903
        %1905 = vdwg.mxu0
        %1906 = vmatpush.msra.mxu0 %v1649
        %1907 = vmatpush.msra.mxu0 %v1648
        %1908 = vmatpush.msra.mxu0 %v1647
        %1909 = vmatpush.msra.mxu0 %v1646
        %1910 = vmatpush.msra.mxu0 %v1645
        %1911 = vmatpush.msra.mxu0 %v1644
        %1912 = vmatpush.msra.mxu0 %v1643
        %1913 = vmatpush.msra.mxu0 %v1642
        %1914 = vmatpush.msra.mxu0 %v1641
        %1915 = vmatpush.msra.mxu0 %v1640
        %1916 = vmatpush.msra.mxu0 %v1639
        %1917 = vmatpush.msra.mxu0 %v1638
        %1918 = vmatpush.msra.mxu0 %v1637
        %1919 = vmatpush.msra.mxu0 %v1636
        %1920 = vmatpush.msra.mxu0 %v1635
        %1921 = vmatpush.msra.mxu0 %v1634
        %1922 = vmatmul.f32.gmra.mxu0 %v1542
        %v1923 = vpop.f32.mrf.mxu0
        %v1924 = vadd.f32 %v1904, %v1923
        %1925 = vdwg.mxu0
        %1926 = vmatpush.msra.mxu0 %v1665
        %1927 = vmatpush.msra.mxu0 %v1664
        %1928 = vmatpush.msra.mxu0 %v1663
        %1929 = vmatpush.msra.mxu0 %v1662
        %1930 = vmatpush.msra.mxu0 %v1661
        %1931 = vmatpush.msra.mxu0 %v1660
        %1932 = vmatpush.msra.mxu0 %v1659
        %1933 = vmatpush.msra.mxu0 %v1658
        %1934 = vmatpush.msra.mxu0 %v1657
        %1935 = vmatpush.msra.mxu0 %v1656
        %1936 = vmatpush.msra.mxu0 %v1655
        %1937 = vmatpush.msra.mxu0 %v1654
        %1938 = vmatpush.msra.mxu0 %v1653
        %1939 = vmatpush.msra.mxu0 %v1652
        %1940 = vmatpush.msra.mxu0 %v1651
        %1941 = vmatpush.msra.mxu0 %v1650
        %1942 = vmatmul.f32.gmra.mxu0 %v1543
        %v1943 = vpop.f32.mrf.mxu0
        %v1944 = vadd.f32 %v1924, %v1943
        %1945 = vdwg.mxu0
        %1946 = vmatpush.msra.mxu0 %v1681
        %1947 = vmatpush.msra.mxu0 %v1680
        %1948 = vmatpush.msra.mxu0 %v1679
        %1949 = vmatpush.msra.mxu0 %v1678
        %1950 = vmatpush.msra.mxu0 %v1677
        %1951 = vmatpush.msra.mxu0 %v1676
        %1952 = vmatpush.msra.mxu0 %v1675
        %1953 = vmatpush.msra.mxu0 %v1674
        %1954 = vmatpush.msra.mxu0 %v1673
        %1955 = vmatpush.msra.mxu0 %v1672
        %1956 = vmatpush.msra.mxu0 %v1671
        %1957 = vmatpush.msra.mxu0 %v1670
        %1958 = vmatpush.msra.mxu0 %v1669
        %1959 = vmatpush.msra.mxu0 %v1668
        %1960 = vmatpush.msra.mxu0 %v1667
        %1961 = vmatpush.msra.mxu0 %v1666
        %1962 = vmatmul.f32.gmra.mxu0 %v1544
        %v1963 = vpop.f32.mrf.mxu0
        %v1964 = vadd.f32 %v1944, %v1963
        %1965 = vdwg.mxu0
        %1966 = vmatpush.msra.mxu0 %v1697
        %1967 = vmatpush.msra.mxu0 %v1696
        %1968 = vmatpush.msra.mxu0 %v1695
        %1969 = vmatpush.msra.mxu0 %v1694
        %1970 = vmatpush.msra.mxu0 %v1693
        %1971 = vmatpush.msra.mxu0 %v1692
        %1972 = vmatpush.msra.mxu0 %v1691
        %1973 = vmatpush.msra.mxu0 %v1690
        %1974 = vmatpush.msra.mxu0 %v1689
        %1975 = vmatpush.msra.mxu0 %v1688
        %1976 = vmatpush.msra.mxu0 %v1687
        %1977 = vmatpush.msra.mxu0 %v1686
        %1978 = vmatpush.msra.mxu0 %v1685
        %1979 = vmatpush.msra.mxu0 %v1684
        %1980 = vmatpush.msra.mxu0 %v1683
        %1981 = vmatpush.msra.mxu0 %v1682
        %1982 = vmatmul.f32.gmra.mxu0 %v1545
        %v1983 = vpop.f32.mrf.mxu0
        %v1984 = vadd.f32 %v1964, %v1983
        %1985 = vdwg.mxu0
        %1986 = vmatpush.msra.mxu0 %v1713
        %1987 = vmatpush.msra.mxu0 %v1712
        %1988 = vmatpush.msra.mxu0 %v1711
        %1989 = vmatpush.msra.mxu0 %v1710
        %1990 = vmatpush.msra.mxu0 %v1709
        %1991 = vmatpush.msra.mxu0 %v1708
        %1992 = vmatpush.msra.mxu0 %v1707
        %1993 = vmatpush.msra.mxu0 %v1706
        %1994 = vmatpush.msra.mxu0 %v1705
        %1995 = vmatpush.msra.mxu0 %v1704
        %1996 = vmatpush.msra.mxu0 %v1703
        %1997 = vmatpush.msra.mxu0 %v1702
        %1998 = vmatpush.msra.mxu0 %v1701
        %1999 = vmatpush.msra.mxu0 %v1700
        %2000 = vmatpush.msra.mxu0 %v1699
        %2001 = vmatpush.msra.mxu0 %v1698
        %2002 = vmatmul.f32.gmra.mxu0 %v1546
        %v2003 = vpop.f32.mrf.mxu0
        %v2004 = vadd.f32 %v1984, %v2003
        %2005 = vdwg.mxu0
        %2006 = vmatpush.msra.mxu0 %v1729
        %2007 = vmatpush.msra.mxu0 %v1728
        %2008 = vmatpush.msra.mxu0 %v1727
        %2009 = vmatpush.msra.mxu0 %v1726
        %2010 = vmatpush.msra.mxu0 %v1725
        %2011 = vmatpush.msra.mxu0 %v1724
        %2012 = vmatpush.msra.mxu0 %v1723
        %2013 = vmatpush.msra.mxu0 %v1722
        %2014 = vmatpush.msra.mxu0 %v1721
        %2015 = vmatpush.msra.mxu0 %v1720
        %2016 = vmatpush.msra.mxu0 %v1719
        %2017 = vmatpush.msra.mxu0 %v1718
        %2018 = vmatpush.msra.mxu0 %v1717
        %2019 = vmatpush.msra.mxu0 %v1716
        %2020 = vmatpush.msra.mxu0 %v1715
        %2021 = vmatpush.msra.mxu0 %v1714
        %2022 = vmatmul.f32.gmra.mxu0 %v1547
        %v2023 = vpop.f32.mrf.mxu0
        %v2024 = vadd.f32 %v2004, %v2023
        %2025 = vdwg.mxu0
        %2026 = vmatpush.msra.mxu0 %v1745
        %2027 = vmatpush.msra.mxu0 %v1744
        %2028 = vmatpush.msra.mxu0 %v1743
        %2029 = vmatpush.msra.mxu0 %v1742
        %2030 = vmatpush.msra.mxu0 %v1741
        %2031 = vmatpush.msra.mxu0 %v1740
        %2032 = vmatpush.msra.mxu0 %v1739
        %2033 = vmatpush.msra.mxu0 %v1738
        %2034 = vmatpush.msra.mxu0 %v1737
        %2035 = vmatpush.msra.mxu0 %v1736
        %2036 = vmatpush.msra.mxu0 %v1735
        %2037 = vmatpush.msra.mxu0 %v1734
        %2038 = vmatpush.msra.mxu0 %v1733
        %2039 = vmatpush.msra.mxu0 %v1732
        %2040 = vmatpush.msra.mxu0 %v1731
        %2041 = vmatpush.msra.mxu0 %v1730
        %2042 = vmatmul.f32.gmra.mxu0 %v1548
        %v2043 = vpop.f32.mrf.mxu0
        %v2044 = vadd.f32 %v2024, %v2043
        %2045 = vdwg.mxu0
        %2046 = vmatpush.msra.mxu0 %v1761
        %2047 = vmatpush.msra.mxu0 %v1760
        %2048 = vmatpush.msra.mxu0 %v1759
        %2049 = vmatpush.msra.mxu0 %v1758
        %2050 = vmatpush.msra.mxu0 %v1757
        %2051 = vmatpush.msra.mxu0 %v1756
        %2052 = vmatpush.msra.mxu0 %v1755
        %2053 = vmatpush.msra.mxu0 %v1754
        %2054 = vmatpush.msra.mxu0 %v1753
        %2055 = vmatpush.msra.mxu0 %v1752
        %2056 = vmatpush.msra.mxu0 %v1751
        %2057 = vmatpush.msra.mxu0 %v1750
        %2058 = vmatpush.msra.mxu0 %v1749
        %2059 = vmatpush.msra.mxu0 %v1748
        %2060 = vmatpush.msra.mxu0 %v1747
        %2061 = vmatpush.msra.mxu0 %v1746
        %2062 = vmatmul.f32.gmra.mxu0 %v1549
        %v2063 = vpop.f32.mrf.mxu0
        %v2064 = vadd.f32 %v2044, %v2063
        %2065 = vdwg.mxu0
        %2066 = vmatpush.msra.mxu0 %v1777
        %2067 = vmatpush.msra.mxu0 %v1776
        %2068 = vmatpush.msra.mxu0 %v1775
        %2069 = vmatpush.msra.mxu0 %v1774
        %2070 = vmatpush.msra.mxu0 %v1773
        %2071 = vmatpush.msra.mxu0 %v1772
        %2072 = vmatpush.msra.mxu0 %v1771
        %2073 = vmatpush.msra.mxu0 %v1770
        %2074 = vmatpush.msra.mxu0 %v1769
        %2075 = vmatpush.msra.mxu0 %v1768
        %2076 = vmatpush.msra.mxu0 %v1767
        %2077 = vmatpush.msra.mxu0 %v1766
        %2078 = vmatpush.msra.mxu0 %v1765
        %2079 = vmatpush.msra.mxu0 %v1764
        %2080 = vmatpush.msra.mxu0 %v1763
        %2081 = vmatpush.msra.mxu0 %v1762
        %2082 = vmatmul.f32.gmra.mxu0 %v1550
        %v2083 = vpop.f32.mrf.mxu0
        %v2084 = vadd.f32 %v2064, %v2083
        %2085 = vdwg.mxu0
        %2086 = vmatpush.msra.mxu0 %v1793
        %2087 = vmatpush.msra.mxu0 %v1792
        %2088 = vmatpush.msra.mxu0 %v1791
        %2089 = vmatpush.msra.mxu0 %v1790
        %2090 = vmatpush.msra.mxu0 %v1789
        %2091 = vmatpush.msra.mxu0 %v1788
        %2092 = vmatpush.msra.mxu0 %v1787
        %2093 = vmatpush.msra.mxu0 %v1786
        %2094 = vmatpush.msra.mxu0 %v1785
        %2095 = vmatpush.msra.mxu0 %v1784
        %2096 = vmatpush.msra.mxu0 %v1783
        %2097 = vmatpush.msra.mxu0 %v1782
        %2098 = vmatpush.msra.mxu0 %v1781
        %2099 = vmatpush.msra.mxu0 %v1780
        %2100 = vmatpush.msra.mxu0 %v1779
        %2101 = vmatpush.msra.mxu0 %v1778
        %2102 = vmatmul.f32.gmra.mxu0 %v1551
        %v2103 = vpop.f32.mrf.mxu0
        %v2104 = vadd.f32 %v2084, %v2103
        %2105 = vdwg.mxu0
        %2106 = vmatpush.msra.mxu0 %v1809
        %2107 = vmatpush.msra.mxu0 %v1808
        %2108 = vmatpush.msra.mxu0 %v1807
        %2109 = vmatpush.msra.mxu0 %v1806
        %2110 = vmatpush.msra.mxu0 %v1805
        %2111 = vmatpush.msra.mxu0 %v1804
        %2112 = vmatpush.msra.mxu0 %v1803
        %2113 = vmatpush.msra.mxu0 %v1802
        %2114 = vmatpush.msra.mxu0 %v1801
        %2115 = vmatpush.msra.mxu0 %v1800
        %2116 = vmatpush.msra.mxu0 %v1799
        %2117 = vmatpush.msra.mxu0 %v1798
        %2118 = vmatpush.msra.mxu0 %v1797
        %2119 = vmatpush.msra.mxu0 %v1796
        %2120 = vmatpush.msra.mxu0 %v1795
        %2121 = vmatpush.msra.mxu0 %v1794
        %2122 = vmatmul.f32.gmra.mxu0 %v1552
        %v2123 = vpop.f32.mrf.mxu0
        %v2124 = vadd.f32 %v2104, %v2123
        %2125 = vdwg.mxu0
        %2126 = vmatpush.msra.mxu0 %v1825
        %2127 = vmatpush.msra.mxu0 %v1824
        %2128 = vmatpush.msra.mxu0 %v1823
        %2129 = vmatpush.msra.mxu0 %v1822
        %2130 = vmatpush.msra.mxu0 %v1821
        %2131 = vmatpush.msra.mxu0 %v1820
        %2132 = vmatpush.msra.mxu0 %v1819
        %2133 = vmatpush.msra.mxu0 %v1818
        %2134 = vmatpush.msra.mxu0 %v1817
        %2135 = vmatpush.msra.mxu0 %v1816
        %2136 = vmatpush.msra.mxu0 %v1815
        %2137 = vmatpush.msra.mxu0 %v1814
        %2138 = vmatpush.msra.mxu0 %v1813
        %2139 = vmatpush.msra.mxu0 %v1812
        %2140 = vmatpush.msra.mxu0 %v1811
        %2141 = vmatpush.msra.mxu0 %v1810
        %2142 = vmatmul.f32.gmra.mxu0 %v1553
        %v2143 = vpop.f32.mrf.mxu0
        %v2144 = vadd.f32 %v2124, %v2143
        %2145 = vdwg.mxu0
        %v2146 = vmax.f32 %v2144, 0.0
        %2147 = vst [vmem:[%s289] sm:$0xff] %v2146
        %2148 = vmax.xlane.f32.xlu0 %v2146
        %v2149 = vpop.xlane.xlu0 %2148
        %vm2150 = vcmask 7168
        %2151 = vst.msk [vmem:[%s304] sm:$0xff] %vm2150, %v2149
        %s2152 = sand.u32 %s123, 1
        %s2153 = scalar_lea.sflag [#allocation4], %s2152
        %s2154 = sand.u32 %s123, 1
        %s2155 = smul.addr %s2154, 128
        %s2156 = scalar_lea.vmem [#allocation7], %s2155
        %s2157 = sand.u32 %s149, 1
        %s2158 = scalar_lea.sflag [#allocation9], %s2157
        %s2159 = sand.u32 %s149, 1
        %s2160 = smul.addr %s2159, 8
        %s2161 = scalar_lea.vmem [#allocation8], %s2160
        %p2162 = scmp.lt.s32.totalorder %s26, 1
        %s2163 = scalar_select %p2162, %s26, 1
        %s2164 = smul.addr %s2163, 8
        %s2165 = scalar_lea.vmem %s6, %s2164
        // Predicated region
        $region45: #{tpu_custom_call.1} parent=35 // pred_check
          %p2166 = pneg %p133
        $region46: #{tpu_custom_call.1} parent=35 // pred_check_branch
          %2168 = sbr.rel (%p2166) target = $region48
        $region47: #{tpu_custom_call.1} parent=35 // pred_region
          %2170 = vsyncadd %s2153, 0
          %s2171 = smul.addr %s26, 16
          %s2172 = smul.addr %s2171, 8
          %s2173 = scalar_lea.hbm %s4, %s2172
          %s2175 = sshll.u32 %s2156, 4
          %s2176 = int_to_ptr.vmem [resolvable:$true] %s2175
          %s2177 = sshll.u32 %s2173, 4
          %s2178 = int_to_ptr.hbm [resolvable:$true] %s2177
          %2180 = dma.vmem_to_hbm [thread:$0]  %s2176, 2048, %s2178, %s2153
        $region48: #{tpu_custom_call.1} parent=35 // pred_fallthru
          _
        // Predicated region
        $region49: #{tpu_custom_call.1} parent=35 // pred_check
          %p2181 = pneg %p159
        $region50: #{tpu_custom_call.1} parent=35 // pred_check_branch
          %2183 = sbr.rel (%p2181) target = $region52
        $region51: #{tpu_custom_call.1} parent=35 // pred_region
          %2185 = vsyncadd %s2158, 0
          %s2186 = smul.addr %s26, 8
          %s2187 = scalar_lea.hbm %s5, %s2186
          %s2189 = sshll.u32 %s2161, 4
          %s2190 = int_to_ptr.vmem [resolvable:$true] %s2189
          %s2191 = sshll.u32 %s2187, 4
          %s2192 = int_to_ptr.hbm [resolvable:$true] %s2191
          %2194 = dma.vmem_to_hbm [thread:$0]  %s2190, 128, %s2192, %s2158
        $region52: #{tpu_custom_call.1} parent=35 // pred_fallthru
          _
        // Predicated region
        $region53: #{tpu_custom_call.1} parent=35 // pred_check
          %p2195 = pneg %p185
        $region54: #{tpu_custom_call.1} parent=35 // pred_check_branch
          %2197 = sbr.rel (%p2195) target = $region56
        $region55: #{tpu_custom_call.1} parent=35 // pred_region
          _
        $region56: #{tpu_custom_call.1} parent=35 // pred_fallthru
          _
      $region36: #{tpu_custom_call.1} parent=5 // pred_fallthru
        _
      %p2198 = scmp.le.s32.totalorder 2, %s21
      // Predicated region
      $region57: #{tpu_custom_call.1} parent=5 // pred_check
        %p2199 = pneg %p2198
      $region58: #{tpu_custom_call.1} parent=5 // pred_check_branch
        %2201 = sbr.rel (%p2199) target = $region60
      $region59: #{tpu_custom_call.1} parent=5 // pred_region
        %s2202 = ssub.s32 %s21, 2
        // Predicated region
        $region61: #{tpu_custom_call.1} parent=59 // pred_check
          %p2203 = pneg %p139
        $region62: #{tpu_custom_call.1} parent=59 // pred_check_branch
          %2205 = sbr.rel (%p2203) target = $region64
        $region63: #{tpu_custom_call.1} parent=59 // pred_region
          %s2206 = sand.u32 %s124, 1
          %s2207 = scalar_lea.sflag [#allocation4], %s2206
          %s2208 = sand.u32 %s124, 1
          %s2209 = smul.addr %s2208, 128
          %s2210 = scalar_lea.vmem [#allocation7], %s2209
          %2212 = dma.done %s2207, 2048
        $region64: #{tpu_custom_call.1} parent=59 // pred_fallthru
          _
        // Predicated region
        $region65: #{tpu_custom_call.1} parent=59 // pred_check
          %p2213 = pneg %p165
        $region66: #{tpu_custom_call.1} parent=59 // pred_check_branch
          %2215 = sbr.rel (%p2213) target = $region68
        $region67: #{tpu_custom_call.1} parent=59 // pred_region
          %s2216 = sand.u32 %s150, 1
          %s2217 = scalar_lea.sflag [#allocation9], %s2216
          %s2218 = sand.u32 %s150, 1
          %s2219 = smul.addr %s2218, 8
          %s2220 = scalar_lea.vmem [#allocation8], %s2219
          %2222 = dma.done %s2217, 128
        $region68: #{tpu_custom_call.1} parent=59 // pred_fallthru
          _
        // Predicated region
        $region69: #{tpu_custom_call.1} parent=59 // pred_check
          %p2223 = pneg %p191
        $region70: #{tpu_custom_call.1} parent=59 // pred_check_branch
          %2225 = sbr.rel (%p2223) target = $region72
        $region71: #{tpu_custom_call.1} parent=59 // pred_region
          %p2226 = scmp.lt.s32.totalorder %s27, 1
          %s2227 = scalar_select %p2226, %s27, 1
          %s2228 = smul.addr %s2227, 8
          %s2229 = scalar_lea.vmem %s6, %s2228
        $region72: #{tpu_custom_call.1} parent=59 // pred_fallthru
          _
      $region60: #{tpu_custom_call.1} parent=5 // pred_fallthru
        _
    $region6: #{tpu_custom_call.1} parent=1 // loop_footer
      %s25 = sadd.s32 1, %s21
    $region7: #{tpu_custom_call.1} parent=1 // loop_footer_branch
      %20 = sbr.rel target = $region3
    $region8: #{tpu_custom_call.1} parent=1 // loop_exit
      _
    %2230 = vsyncpa [#allocation3], 1
    %s2231 = scalar_lea.sflag [#allocation3], 1
    %2232 = vsyncpa %s2231, 1
    %2233 = vsyncpa [#allocation6], 1
    %2234 = vsyncpa [#allocation4], 1
    %s2235 = scalar_lea.sflag [#allocation4], 1
    %2236 = vsyncpa %s2235, 1
    %2237 = vsyncpa [#allocation9], 1
    %s2238 = scalar_lea.sflag [#allocation9], 1
    %2239 = vsyncpa %s2238, 1

</llo_original>
